<compile_context>
chip_gen: v7x
topology: tpu7x:2x2x1
jax: 0.10.0
libtpu: 0.0.40
codegen_flags: <defaults>
</compile_context>

<pallas_src>
import functools

import jax
import jax.numpy as jnp
from jax import lax
from jax.experimental import pallas as pl
from jax.experimental.pallas import tpu as pltpu  # noqa: F401  (TPU-specific tuning hooks)

SEQ = 8
BATCH = 2
HIDDEN = 32
N_HEADS = 4
HEAD_DIM = HIDDEN // N_HEADS
FFN = 4 * HIDDEN
VOCAB = 50
VOCAB_PAD = 64      # sublane-aligned vocab rows for the one-hot contraction
PAD_ID = 0          # synthetic src_vocab.stoi['[PAD]']

assert SEQ & (SEQ - 1) == 0, "SEQ must be a power of two (xor block-mask trick)"

# ---- row offsets inside the (217, H) "cols32" slab --------------------------------
R_WORD = 0                                  # word embedding (VOCAB_PAD rows)
R_POS = VOCAB_PAD                           # pos embedding pre-tiled over batch (B*S rows)
R_W2 = VOCAB_PAD + BATCH * SEQ              # FFN down-projection (FFN rows)
R_G0 = R_W2 + FFN                           # then 9 single-row vectors
R_B0, R_G1, R_B1, R_G2, R_B2, R_BO, R_BFF2, R_BP = range(R_G0 + 1, R_G0 + 9)
COLS32_ROWS = R_BP + 1                      # 217

# ---- column offsets inside the (H, 288) "wA" slab and the (1, 224) "bA" slab ------
C_WQKV = 0                                  # (H, 3H)   fused QKV (Q pre-scaled)
C_WO = 3 * HIDDEN                           # (H, H)    attention output proj
C_W1 = C_WO + HIDDEN                        # (H, FFN)  FFN up-projection (128-aligned)
C_WP = C_W1 + FFN                           # (H, H)    pooler weight (128-aligned)
B_FF1 = 0                                   # (1, FFN)  FFN up-proj bias
B_QKV = FFN                                 # (1, 3H)   fused QKV bias (128-aligned)


def _layernorm(x, g, b, eps=1e-12):
    mu = jnp.mean(x, axis=-1, keepdims=True)
    var = jnp.mean((x - mu) ** 2, axis=-1, keepdims=True)
    return (x - mu) * lax.rsqrt(var + eps) * g + b


def encoder_kernel(tok_col_ref, tok_row_ref, cols_ref, wA_ref, bA_ref,
                   enc_ref, pool_ref):
    f32 = jnp.float32
    B, S, H, NH, HD = BATCH, SEQ, HIDDEN, N_HEADS, HEAD_DIM
    N = B * S

    # ---- fused embedding lookup: one-hot matmul on the MXU ------------------------
    tok_col = tok_col_ref[...]                                             # (N, 1) int32
    onehot = (lax.broadcasted_iota(jnp.int32, (N, VOCAB_PAD), 1)
              == tok_col).astype(f32)                                      # (N, 64)
    emb = jnp.dot(onehot, cols_ref[R_WORD:R_WORD + VOCAB_PAD, :],
                  preferred_element_type=f32)                              # (N, H)
    x = _layernorm(emb + cols_ref[R_POS:R_POS + N, :],
                   cols_ref[R_G0:R_G0 + 1, :], cols_ref[R_B0:R_B0 + 1, :])

    # ---- additive attention bias: key padding + block-diagonal same-batch mask ----
    keep = (tok_row_ref[...] != PAD_ID).astype(f32)                        # (1, N) keys
    ri = lax.broadcasted_iota(jnp.int32, (N, N), 0)
    ci = lax.broadcasted_iota(jnp.int32, (N, N), 1)
    same_batch = (ri ^ ci) < S          # i//S == j//S for power-of-two S (pure VPU ops)
    bias2d = jnp.where(same_batch, 0.0, -1e9) + (1.0 - keep) * (-1e9)      # (N, N)

    # ---- fused QKV projection (Q pre-scaled by 1/sqrt(HD) at pack time) -----------
    qkv = (jnp.dot(x, wA_ref[:, C_WQKV:C_WQKV + 3 * H], preferred_element_type=f32)
           + bA_ref[:, B_QKV:B_QKV + 3 * H])                               # (N, 3H)

    # head-major stacks, heads batched into one einsum each: (NH, N, HD)
    qh = jnp.stack([qkv[:, h * HD:(h + 1) * HD] for h in range(NH)], axis=0)
    kh = jnp.stack([qkv[:, H + h * HD:H + (h + 1) * HD] for h in range(NH)], axis=0)
    vh = jnp.stack([qkv[:, 2 * H + h * HD:2 * H + (h + 1) * HD] for h in range(NH)], axis=0)

    s = jnp.einsum('nqd,nkd->nqk', qh, kh,
                   preferred_element_type=f32) + bias2d                    # (NH, N, N)
    m = jnp.max(s, axis=-1, keepdims=True)
    p = jnp.exp(s - m)
    p = p / jnp.sum(p, axis=-1, keepdims=True)              # exact divide (accuracy)
    ctx_h = jnp.einsum('nqk,nkd->nqd', p, vh,
                       preferred_element_type=f32)                         # (NH, N, HD)
    ctx = jnp.concatenate([ctx_h[h] for h in range(NH)], axis=-1)          # (N, H)

    attn = (jnp.dot(ctx, wA_ref[:, C_WO:C_WO + H], preferred_element_type=f32)
            + cols_ref[R_BO:R_BO + 1, :])
    x1 = _layernorm(x + attn, cols_ref[R_G1:R_G1 + 1, :], cols_ref[R_B1:R_B1 + 1, :])

    # ---- feed-forward --------------------------------------------------------------
    h1 = jax.nn.gelu(jnp.dot(x1, wA_ref[:, C_W1:C_W1 + FFN], preferred_element_type=f32)
                     + bA_ref[:, B_FF1:B_FF1 + FFN])
    h2 = (jnp.dot(h1, cols_ref[R_W2:R_W2 + FFN, :], preferred_element_type=f32)
          + cols_ref[R_BFF2:R_BFF2 + 1, :])
    x2 = _layernorm(x1 + h2, cols_ref[R_G2:R_G2 + 1, :], cols_ref[R_B2:R_B2 + 1, :])  # (N, H)

    # ---- outputs: single lane-dense stores ------------------------------------------
    # (S, B*H) row-major is bit-identical to (S, B, H); the wrapper reshape is free.
    enc_ref[...] = jnp.concatenate([x2[b * S:(b + 1) * S, :] for b in range(B)], axis=1)

    cls = jnp.concatenate([x2[b * S:b * S + 1, :] for b in range(B)], axis=0)          # (B, H)
    pool_ref[...] = jnp.tanh(jnp.dot(cls, wA_ref[:, C_WP:C_WP + H],
                                     preferred_element_type=f32)
                             + cols_ref[R_BP:R_BP + 1, :])


def pack_params(p):
    """One-time packing of the raw parameters into 3 DMA slabs."""
    H, HD = HIDDEN, HEAD_DIM
    scale = 1.0 / float(HD) ** 0.5

    word_pad = jnp.zeros((VOCAB_PAD, H), jnp.float32).at[:VOCAB].set(p["word_emb"])
    pos_tiled = jnp.tile(p["pos_emb"], (BATCH, 1))                          # (B*S, H)
    ln_rows = jnp.concatenate(
        [p[k].reshape(1, H) for k in
         ("g0", "b0", "g1", "b1", "g2", "b2", "bo", "bff2", "bp")], axis=0)  # (9, H)
    cols32 = jnp.concatenate([word_pad, pos_tiled, p["w2"], ln_rows], axis=0)
    assert cols32.shape == (COLS32_ROWS, H)

    wqkv = p["wqkv"].at[:, :H].multiply(scale)      # fold 1/sqrt(HD) into Q columns
    bqkv = p["bqkv"].at[:, :H].multiply(scale)
    wA = jnp.concatenate([wqkv, p["wo"], p["w1"], p["wp"]], axis=1)          # (H, 288)
    bA = jnp.concatenate([p["bff1"], bqkv], axis=1)                          # (1, 224)
    return dict(cols32=cols32, wA=wA, bA=bA)


def bert_encoder(tokens, packed):
    """tokens: (seq, batch) int32  ->  (enc_out (S,B,H), embedded (1,B,H))."""
    src = tokens.T                                   # src.permute(1, 0)  -> (B, S)
    B, S = src.shape
    tok_col = src.reshape(B * S, 1)                  # column form for the one-hot rows
    tok_row = src.reshape(1, B * S)                  # row form for the key-padding mask

    # Single grid-free invocation: the whole (B*S, H) = (16, 32) problem plus all
    # packed weights fit VMEM with huge margin on every TPU generation, so all
    # inputs/outputs use the default whole-array VMEM blocks (5 input DMAs total).
    enc2d, pool2d = pl.pallas_call(
        encoder_kernel,
        out_shape=(jax.ShapeDtypeStruct((S, B * HIDDEN), jnp.float32),
                   jax.ShapeDtypeStruct((B, HIDDEN), jnp.float32)),
    )(tok_col, tok_row, packed["cols32"], packed["wA"], packed["bA"])

    # free metadata reshapes back to the module's output layout
    return enc2d.reshape(S, B, HIDDEN), pool2d.reshape(1, B, HIDDEN)


def init_params(key):
    ks = jax.random.split(key, 10)

    def dense(k, shape):
        return (jax.random.normal(k, shape, jnp.float32) * 0.02).astype(jnp.float32)

    H, F = HIDDEN, FFN
    ones, zeros = jnp.ones((1, H), jnp.float32), jnp.zeros((1, H), jnp.float32)
    wq, wk, wv = dense(ks[2], (H, H)), dense(ks[3], (H, H)), dense(ks[4], (H, H))
    return dict(
        word_emb=dense(ks[0], (VOCAB, H)),
        pos_emb=dense(ks[1], (SEQ, H)),
        g0=ones, b0=zeros,
        wqkv=jnp.concatenate([wq, wk, wv], axis=1),   # fused (H, 3H) QKV weight
        bqkv=jnp.zeros((1, 3 * H), jnp.float32),
        wo=dense(ks[5], (H, H)), bo=zeros,
        g1=ones, b1=zeros,
        w1=dense(ks[6], (H, F)), bff1=jnp.zeros((1, F), jnp.float32),
        w2=dense(ks[7], (F, H)), bff2=zeros,
        g2=ones, b2=zeros,
        wp=dense(ks[8], (H, H)), bp=zeros,
    )


if __name__ == "__main__":
    key = jax.random.PRNGKey(0)
    pkey, tkey = jax.random.split(key)
    packed = pack_params(init_params(pkey))

    # tokens: (seq, batch), with some [PAD] at the tail of the second sequence.
    tokens = jax.random.randint(tkey, (SEQ, BATCH), 1, VOCAB, dtype=jnp.int32)
    tokens = tokens.at[-2:, 1].set(PAD_ID)

    run = jax.jit(functools.partial(bert_encoder, packed=packed))
    enc_out, embedded = run(tokens)
    jax.block_until_ready((enc_out, embedded))

    assert enc_out.shape == (SEQ, BATCH, HIDDEN)
    assert embedded.shape == (1, BATCH, HIDDEN)
    assert enc_out.dtype == jnp.float32 and embedded.dtype == jnp.float32
    print("KERNEL_OK")
</pallas_src>

<mosaic_0001>
module attributes {stable_mosaic.version = 11 : i64} {
  func.func @encoder_kernel(%arg0: memref<16x1xi32, #tpu.memory_space<vmem>>, %arg1: memref<1x16xi32, #tpu.memory_space<vmem>>, %arg2: memref<217x32xf32, #tpu.memory_space<vmem>>, %arg3: memref<32x288xf32, #tpu.memory_space<vmem>>, %arg4: memref<1x224xf32, #tpu.memory_space<vmem>>, %arg5: memref<8x64xf32, #tpu.memory_space<vmem>>, %arg6: memref<2x32xf32, #tpu.memory_space<vmem>>) attributes {dimension_semantics = [], scalar_prefetch = 0 : i64, scratch_operands = 0 : i64, tpu.core_type = #tpu.core_type<tc>} {
    %c0 = arith.constant 0 : index
    %c0_0 = arith.constant 0 : index
    %0 = vector.load %arg0[%c0, %c0_0] : memref<16x1xi32, #tpu.memory_space<vmem>>, vector<16x1xi32>
    %1 = tpu.iota {dimensions = array<i32: 1>} : vector<16x64xi32>
    %2 = vector.broadcast %0 : vector<16x1xi32> to vector<16x64xi32>
    %3 = arith.cmpi eq, %1, %2 : vector<16x64xi32>
    %4 = arith.extui %3 : vector<16x64xi1> to vector<16x64xi32>
    %5 = arith.sitofp %4 : vector<16x64xi32> to vector<16x64xf32>
    %c0_1 = arith.constant 0 : index
    %c0_2 = arith.constant 0 : index
    %6 = vector.load %arg2[%c0_1, %c0_2] : memref<217x32xf32, #tpu.memory_space<vmem>>, vector<64x32xf32>
    %cst = arith.constant dense<0.000000e+00> : vector<16x32xf32>
    %7 = tpu.matmul %5, %6, %cst {dimension_numbers = #tpu.dot_dimension_numbers<[1], [0], [0], [1], [0, 0, 1, 1], [], []>} : vector<16x64xf32>, vector<64x32xf32>, vector<16x32xf32> -> vector<16x32xf32>
    %c64 = arith.constant 64 : index
    %c0_3 = arith.constant 0 : index
    %8 = vector.load %arg2[%c64, %c0_3] : memref<217x32xf32, #tpu.memory_space<vmem>>, vector<16x32xf32>
    %9 = arith.addf %7, %8 : vector<16x32xf32>
    %c208 = arith.constant 208 : index
    %c0_4 = arith.constant 0 : index
    %10 = vector.load %arg2[%c208, %c0_4] : memref<217x32xf32, #tpu.memory_space<vmem>>, vector<1x32xf32>
    %c209 = arith.constant 209 : index
    %c0_5 = arith.constant 0 : index
    %11 = vector.load %arg2[%c209, %c0_5] : memref<217x32xf32, #tpu.memory_space<vmem>>, vector<1x32xf32>
    %cst_6 = arith.constant dense<0.000000e+00> : vector<16xf32>
    %12 = vector.multi_reduction <add>, %9, %cst_6 [1] : vector<16x32xf32> to vector<16xf32>
    %13 = vector.shape_cast %12 : vector<16xf32> to vector<16x1xf32>
    %cst_7 = arith.constant 3.200000e+01 : f32
    %14 = vector.broadcast %cst_7 : f32 to vector<16x1xf32>
    %15 = arith.divf %13, %14 : vector<16x1xf32>
    %16 = vector.broadcast %15 : vector<16x1xf32> to vector<16x32xf32>
    %17 = arith.subf %9, %16 : vector<16x32xf32>
    %18 = arith.mulf %17, %17 : vector<16x32xf32>
    %cst_8 = arith.constant dense<0.000000e+00> : vector<16xf32>
    %19 = vector.multi_reduction <add>, %18, %cst_8 [1] : vector<16x32xf32> to vector<16xf32>
    %20 = vector.shape_cast %19 : vector<16xf32> to vector<16x1xf32>
    %cst_9 = arith.constant 3.200000e+01 : f32
    %21 = vector.broadcast %cst_9 : f32 to vector<16x1xf32>
    %22 = arith.divf %20, %21 : vector<16x1xf32>
    %23 = vector.broadcast %15 : vector<16x1xf32> to vector<16x32xf32>
    %24 = arith.subf %9, %23 : vector<16x32xf32>
    %cst_10 = arith.constant 9.99999996E-13 : f32
    %25 = vector.broadcast %cst_10 : f32 to vector<16x1xf32>
    %26 = arith.addf %22, %25 : vector<16x1xf32>
    %27 = math.rsqrt %26 : vector<16x1xf32>
    %28 = vector.broadcast %27 : vector<16x1xf32> to vector<16x32xf32>
    %29 = arith.mulf %24, %28 : vector<16x32xf32>
    %30 = vector.broadcast %10 : vector<1x32xf32> to vector<16x32xf32>
    %31 = arith.mulf %29, %30 : vector<16x32xf32>
    %32 = vector.broadcast %11 : vector<1x32xf32> to vector<16x32xf32>
    %33 = arith.addf %31, %32 : vector<16x32xf32>
    %c0_11 = arith.constant 0 : index
    %c0_12 = arith.constant 0 : index
    %34 = vector.load %arg1[%c0_11, %c0_12] : memref<1x16xi32, #tpu.memory_space<vmem>>, vector<1x16xi32>
    %c0_i32 = arith.constant 0 : i32
    %35 = vector.broadcast %c0_i32 : i32 to vector<1x16xi32>
    %36 = arith.cmpi ne, %34, %35 : vector<1x16xi32>
    %37 = arith.extui %36 : vector<1x16xi1> to vector<1x16xi32>
    %38 = arith.sitofp %37 : vector<1x16xi32> to vector<1x16xf32>
    %39 = tpu.iota {dimensions = array<i32: 0>} : vector<16x16xi32>
    %40 = tpu.iota {dimensions = array<i32: 1>} : vector<16x16xi32>
    %41 = arith.xori %39, %40 : vector<16x16xi32>
    %c8_i32 = arith.constant 8 : i32
    %42 = vector.broadcast %c8_i32 : i32 to vector<16x16xi32>
    %43 = arith.cmpi slt, %41, %42 : vector<16x16xi32>
    %cst_13 = arith.constant 0.000000e+00 : f32
    %cst_14 = arith.constant -1.000000e+09 : f32
    %44 = vector.broadcast %cst_13 : f32 to vector<16x16xf32>
    %45 = vector.broadcast %cst_14 : f32 to vector<16x16xf32>
    %46 = arith.select %43, %44, %45 : vector<16x16xi1>, vector<16x16xf32>
    %cst_15 = arith.constant 1.000000e+00 : f32
    %47 = vector.broadcast %cst_15 : f32 to vector<1x16xf32>
    %48 = arith.subf %47, %38 : vector<1x16xf32>
    %cst_16 = arith.constant -1.000000e+09 : f32
    %49 = vector.broadcast %cst_16 : f32 to vector<1x16xf32>
    %50 = arith.mulf %48, %49 : vector<1x16xf32>
    %51 = vector.broadcast %50 : vector<1x16xf32> to vector<16x16xf32>
    %52 = arith.addf %46, %51 : vector<16x16xf32>
    %c0_17 = arith.constant 0 : index
    %c0_18 = arith.constant 0 : index
    %53 = vector.load %arg3[%c0_17, %c0_18] : memref<32x288xf32, #tpu.memory_space<vmem>>, vector<32x96xf32>
    %cst_19 = arith.constant dense<0.000000e+00> : vector<16x96xf32>
    %54 = tpu.matmul %33, %53, %cst_19 {dimension_numbers = #tpu.dot_dimension_numbers<[1], [0], [0], [1], [0, 0, 1, 1], [], []>} : vector<16x32xf32>, vector<32x96xf32>, vector<16x96xf32> -> vector<16x96xf32>
    %c0_20 = arith.constant 0 : index
    %c128 = arith.constant 128 : index
    %55 = vector.load %arg4[%c0_20, %c128] : memref<1x224xf32, #tpu.memory_space<vmem>>, vector<1x96xf32>
    %56 = vector.broadcast %55 : vector<1x96xf32> to vector<16x96xf32>
    %57 = arith.addf %54, %56 : vector<16x96xf32>
    %58 = vector.extract_strided_slice %57 {offsets = [0, 0], sizes = [16, 8], strides = [1, 1]} : vector<16x96xf32> to vector<16x8xf32>
    %59 = vector.extract_strided_slice %57 {offsets = [0, 8], sizes = [16, 8], strides = [1, 1]} : vector<16x96xf32> to vector<16x8xf32>
    %60 = vector.extract_strided_slice %57 {offsets = [0, 16], sizes = [16, 8], strides = [1, 1]} : vector<16x96xf32> to vector<16x8xf32>
    %61 = vector.extract_strided_slice %57 {offsets = [0, 24], sizes = [16, 8], strides = [1, 1]} : vector<16x96xf32> to vector<16x8xf32>
    %62 = vector.shape_cast %58 : vector<16x8xf32> to vector<1x16x8xf32>
    %63 = vector.shape_cast %59 : vector<16x8xf32> to vector<1x16x8xf32>
    %64 = vector.shape_cast %60 : vector<16x8xf32> to vector<1x16x8xf32>
    %65 = vector.shape_cast %61 : vector<16x8xf32> to vector<1x16x8xf32>
    %66 = tpu.concatenate %62, %63, %64, %65 in 0 : vector<1x16x8xf32>, vector<1x16x8xf32>, vector<1x16x8xf32>, vector<1x16x8xf32> -> vector<4x16x8xf32>
    %67 = vector.extract_strided_slice %57 {offsets = [0, 32], sizes = [16, 8], strides = [1, 1]} : vector<16x96xf32> to vector<16x8xf32>
    %68 = vector.extract_strided_slice %57 {offsets = [0, 40], sizes = [16, 8], strides = [1, 1]} : vector<16x96xf32> to vector<16x8xf32>
    %69 = vector.extract_strided_slice %57 {offsets = [0, 48], sizes = [16, 8], strides = [1, 1]} : vector<16x96xf32> to vector<16x8xf32>
    %70 = vector.extract_strided_slice %57 {offsets = [0, 56], sizes = [16, 8], strides = [1, 1]} : vector<16x96xf32> to vector<16x8xf32>
    %71 = vector.shape_cast %67 : vector<16x8xf32> to vector<1x16x8xf32>
    %72 = vector.shape_cast %68 : vector<16x8xf32> to vector<1x16x8xf32>
    %73 = vector.shape_cast %69 : vector<16x8xf32> to vector<1x16x8xf32>
    %74 = vector.shape_cast %70 : vector<16x8xf32> to vector<1x16x8xf32>
    %75 = tpu.concatenate %71, %72, %73, %74 in 0 : vector<1x16x8xf32>, vector<1x16x8xf32>, vector<1x16x8xf32>, vector<1x16x8xf32> -> vector<4x16x8xf32>
    %76 = vector.extract_strided_slice %57 {offsets = [0, 64], sizes = [16, 8], strides = [1, 1]} : vector<16x96xf32> to vector<16x8xf32>
    %77 = vector.extract_strided_slice %57 {offsets = [0, 72], sizes = [16, 8], strides = [1, 1]} : vector<16x96xf32> to vector<16x8xf32>
    %78 = vector.extract_strided_slice %57 {offsets = [0, 80], sizes = [16, 8], strides = [1, 1]} : vector<16x96xf32> to vector<16x8xf32>
    %79 = vector.extract_strided_slice %57 {offsets = [0, 88], sizes = [16, 8], strides = [1, 1]} : vector<16x96xf32> to vector<16x8xf32>
    %80 = vector.shape_cast %76 : vector<16x8xf32> to vector<1x16x8xf32>
    %81 = vector.shape_cast %77 : vector<16x8xf32> to vector<1x16x8xf32>
    %82 = vector.shape_cast %78 : vector<16x8xf32> to vector<1x16x8xf32>
    %83 = vector.shape_cast %79 : vector<16x8xf32> to vector<1x16x8xf32>
    %84 = tpu.concatenate %80, %81, %82, %83 in 0 : vector<1x16x8xf32>, vector<1x16x8xf32>, vector<1x16x8xf32>, vector<1x16x8xf32> -> vector<4x16x8xf32>
    "tpu.trace_start"() <{level = 10 : i32, message = "nqd,nkd->nqk"}> : () -> ()
    %cst_21 = arith.constant dense<0.000000e+00> : vector<4x16x16xf32>
    %85 = tpu.matmul %66, %75, %cst_21 {dimension_numbers = #tpu.dot_dimension_numbers<[2], [2], [1], [1], [0, 0, 0, 1, 1, 1], [0], [0]>} : vector<4x16x8xf32>, vector<4x16x8xf32>, vector<4x16x16xf32> -> vector<4x16x16xf32>
    "tpu.trace_stop"() : () -> ()
    %86 = vector.shape_cast %52 : vector<16x16xf32> to vector<1x16x16xf32>
    %87 = vector.broadcast %86 : vector<1x16x16xf32> to vector<4x16x16xf32>
    %88 = arith.addf %85, %87 : vector<4x16x16xf32>
    %cst_22 = arith.constant dense<0xFF800000> : vector<4x16xf32>
    %89 = vector.multi_reduction <maximumf>, %88, %cst_22 [2] : vector<4x16x16xf32> to vector<4x16xf32>
    %90 = vector.shape_cast %89 : vector<4x16xf32> to vector<4x16x1xf32>
    %91 = vector.broadcast %90 : vector<4x16x1xf32> to vector<4x16x16xf32>
    %92 = arith.subf %88, %91 : vector<4x16x16xf32>
    %93 = math.exp %92 : vector<4x16x16xf32>
    %cst_23 = arith.constant dense<0.000000e+00> : vector<4x16xf32>
    %94 = vector.multi_reduction <add>, %93, %cst_23 [2] : vector<4x16x16xf32> to vector<4x16xf32>
    %95 = vector.shape_cast %94 : vector<4x16xf32> to vector<4x16x1xf32>
    %96 = vector.broadcast %95 : vector<4x16x1xf32> to vector<4x16x16xf32>
    %97 = arith.divf %93, %96 : vector<4x16x16xf32>
    "tpu.trace_start"() <{level = 10 : i32, message = "nqk,nkd->nqd"}> : () -> ()
    %cst_24 = arith.constant dense<0.000000e+00> : vector<4x16x8xf32>
    %98 = tpu.matmul %97, %84, %cst_24 {dimension_numbers = #tpu.dot_dimension_numbers<[2], [1], [1], [2], [0, 0, 0, 1, 1, 2], [0], [0]>} : vector<4x16x16xf32>, vector<4x16x8xf32>, vector<4x16x8xf32> -> vector<4x16x8xf32>
    "tpu.trace_stop"() : () -> ()
    %99 = vector.extract_strided_slice %98 {offsets = [0, 0, 0], sizes = [1, 16, 8], strides = [1, 1, 1]} : vector<4x16x8xf32> to vector<1x16x8xf32>
    %100 = vector.shape_cast %99 : vector<1x16x8xf32> to vector<16x8xf32>
    %101 = vector.extract_strided_slice %98 {offsets = [1, 0, 0], sizes = [1, 16, 8], strides = [1, 1, 1]} : vector<4x16x8xf32> to vector<1x16x8xf32>
    %102 = vector.shape_cast %101 : vector<1x16x8xf32> to vector<16x8xf32>
    %103 = vector.extract_strided_slice %98 {offsets = [2, 0, 0], sizes = [1, 16, 8], strides = [1, 1, 1]} : vector<4x16x8xf32> to vector<1x16x8xf32>
    %104 = vector.shape_cast %103 : vector<1x16x8xf32> to vector<16x8xf32>
    %105 = vector.extract_strided_slice %98 {offsets = [3, 0, 0], sizes = [1, 16, 8], strides = [1, 1, 1]} : vector<4x16x8xf32> to vector<1x16x8xf32>
    %106 = vector.shape_cast %105 : vector<1x16x8xf32> to vector<16x8xf32>
    %107 = tpu.concatenate %100, %102, %104, %106 in 1 : vector<16x8xf32>, vector<16x8xf32>, vector<16x8xf32>, vector<16x8xf32> -> vector<16x32xf32>
    %c0_25 = arith.constant 0 : index
    %c96 = arith.constant 96 : index
    %108 = vector.load %arg3[%c0_25, %c96] : memref<32x288xf32, #tpu.memory_space<vmem>>, vector<32x32xf32>
    %cst_26 = arith.constant dense<0.000000e+00> : vector<16x32xf32>
    %109 = tpu.matmul %107, %108, %cst_26 {dimension_numbers = #tpu.dot_dimension_numbers<[1], [0], [0], [1], [0, 0, 1, 1], [], []>} : vector<16x32xf32>, vector<32x32xf32>, vector<16x32xf32> -> vector<16x32xf32>
    %c214 = arith.constant 214 : index
    %c0_27 = arith.constant 0 : index
    %110 = vector.load %arg2[%c214, %c0_27] : memref<217x32xf32, #tpu.memory_space<vmem>>, vector<1x32xf32>
    %111 = vector.broadcast %110 : vector<1x32xf32> to vector<16x32xf32>
    %112 = arith.addf %109, %111 : vector<16x32xf32>
    %113 = arith.addf %33, %112 : vector<16x32xf32>
    %c210 = arith.constant 210 : index
    %c0_28 = arith.constant 0 : index
    %114 = vector.load %arg2[%c210, %c0_28] : memref<217x32xf32, #tpu.memory_space<vmem>>, vector<1x32xf32>
    %c211 = arith.constant 211 : index
    %c0_29 = arith.constant 0 : index
    %115 = vector.load %arg2[%c211, %c0_29] : memref<217x32xf32, #tpu.memory_space<vmem>>, vector<1x32xf32>
    %cst_30 = arith.constant dense<0.000000e+00> : vector<16xf32>
    %116 = vector.multi_reduction <add>, %113, %cst_30 [1] : vector<16x32xf32> to vector<16xf32>
    %117 = vector.shape_cast %116 : vector<16xf32> to vector<16x1xf32>
    %cst_31 = arith.constant 3.200000e+01 : f32
    %118 = vector.broadcast %cst_31 : f32 to vector<16x1xf32>
    %119 = arith.divf %117, %118 : vector<16x1xf32>
    %120 = vector.broadcast %119 : vector<16x1xf32> to vector<16x32xf32>
    %121 = arith.subf %113, %120 : vector<16x32xf32>
    %122 = arith.mulf %121, %121 : vector<16x32xf32>
    %cst_32 = arith.constant dense<0.000000e+00> : vector<16xf32>
    %123 = vector.multi_reduction <add>, %122, %cst_32 [1] : vector<16x32xf32> to vector<16xf32>
    %124 = vector.shape_cast %123 : vector<16xf32> to vector<16x1xf32>
    %cst_33 = arith.constant 3.200000e+01 : f32
    %125 = vector.broadcast %cst_33 : f32 to vector<16x1xf32>
    %126 = arith.divf %124, %125 : vector<16x1xf32>
    %127 = vector.broadcast %119 : vector<16x1xf32> to vector<16x32xf32>
    %128 = arith.subf %113, %127 : vector<16x32xf32>
    %cst_34 = arith.constant 9.99999996E-13 : f32
    %129 = vector.broadcast %cst_34 : f32 to vector<16x1xf32>
    %130 = arith.addf %126, %129 : vector<16x1xf32>
    %131 = math.rsqrt %130 : vector<16x1xf32>
    %132 = vector.broadcast %131 : vector<16x1xf32> to vector<16x32xf32>
    %133 = arith.mulf %128, %132 : vector<16x32xf32>
    %134 = vector.broadcast %114 : vector<1x32xf32> to vector<16x32xf32>
    %135 = arith.mulf %133, %134 : vector<16x32xf32>
    %136 = vector.broadcast %115 : vector<1x32xf32> to vector<16x32xf32>
    %137 = arith.addf %135, %136 : vector<16x32xf32>
    %c0_35 = arith.constant 0 : index
    %c128_36 = arith.constant 128 : index
    %138 = vector.load %arg3[%c0_35, %c128_36] : memref<32x288xf32, #tpu.memory_space<vmem>>, vector<32x128xf32>
    %cst_37 = arith.constant dense<0.000000e+00> : vector<16x128xf32>
    %139 = tpu.matmul %137, %138, %cst_37 {dimension_numbers = #tpu.dot_dimension_numbers<[1], [0], [0], [1], [0, 0, 1, 1], [], []>} : vector<16x32xf32>, vector<32x128xf32>, vector<16x128xf32> -> vector<16x128xf32>
    %c0_38 = arith.constant 0 : index
    %c0_39 = arith.constant 0 : index
    %140 = vector.load %arg4[%c0_38, %c0_39] : memref<1x224xf32, #tpu.memory_space<vmem>>, vector<1x128xf32>
    %141 = vector.broadcast %140 : vector<1x128xf32> to vector<16x128xf32>
    %142 = arith.addf %139, %141 : vector<16x128xf32>
    %143 = arith.mulf %142, %142 : vector<16x128xf32>
    %144 = arith.mulf %142, %143 : vector<16x128xf32>
    %cst_40 = arith.constant 4.471500e-02 : f32
    %145 = vector.broadcast %cst_40 : f32 to vector<16x128xf32>
    %146 = arith.mulf %145, %144 : vector<16x128xf32>
    %147 = arith.addf %142, %146 : vector<16x128xf32>
    %cst_41 = arith.constant 0.797884583 : f32
    %148 = vector.broadcast %cst_41 : f32 to vector<16x128xf32>
    %149 = arith.mulf %148, %147 : vector<16x128xf32>
    %150 = math.tanh %149 : vector<16x128xf32>
    %cst_42 = arith.constant 1.000000e+00 : f32
    %151 = vector.broadcast %cst_42 : f32 to vector<16x128xf32>
    %152 = arith.addf %151, %150 : vector<16x128xf32>
    %cst_43 = arith.constant 5.000000e-01 : f32
    %153 = vector.broadcast %cst_43 : f32 to vector<16x128xf32>
    %154 = arith.mulf %153, %152 : vector<16x128xf32>
    %155 = arith.mulf %142, %154 : vector<16x128xf32>
    %c80 = arith.constant 80 : index
    %c0_44 = arith.constant 0 : index
    %156 = vector.load %arg2[%c80, %c0_44] : memref<217x32xf32, #tpu.memory_space<vmem>>, vector<128x32xf32>
    %cst_45 = arith.constant dense<0.000000e+00> : vector<16x32xf32>
    %157 = tpu.matmul %155, %156, %cst_45 {dimension_numbers = #tpu.dot_dimension_numbers<[1], [0], [0], [1], [0, 0, 1, 1], [], []>} : vector<16x128xf32>, vector<128x32xf32>, vector<16x32xf32> -> vector<16x32xf32>
    %c215 = arith.constant 215 : index
    %c0_46 = arith.constant 0 : index
    %158 = vector.load %arg2[%c215, %c0_46] : memref<217x32xf32, #tpu.memory_space<vmem>>, vector<1x32xf32>
    %159 = vector.broadcast %158 : vector<1x32xf32> to vector<16x32xf32>
    %160 = arith.addf %157, %159 : vector<16x32xf32>
    %161 = arith.addf %137, %160 : vector<16x32xf32>
    %c212 = arith.constant 212 : index
    %c0_47 = arith.constant 0 : index
    %162 = vector.load %arg2[%c212, %c0_47] : memref<217x32xf32, #tpu.memory_space<vmem>>, vector<1x32xf32>
    %c213 = arith.constant 213 : index
    %c0_48 = arith.constant 0 : index
    %163 = vector.load %arg2[%c213, %c0_48] : memref<217x32xf32, #tpu.memory_space<vmem>>, vector<1x32xf32>
    %cst_49 = arith.constant dense<0.000000e+00> : vector<16xf32>
    %164 = vector.multi_reduction <add>, %161, %cst_49 [1] : vector<16x32xf32> to vector<16xf32>
    %165 = vector.shape_cast %164 : vector<16xf32> to vector<16x1xf32>
    %cst_50 = arith.constant 3.200000e+01 : f32
    %166 = vector.broadcast %cst_50 : f32 to vector<16x1xf32>
    %167 = arith.divf %165, %166 : vector<16x1xf32>
    %168 = vector.broadcast %167 : vector<16x1xf32> to vector<16x32xf32>
    %169 = arith.subf %161, %168 : vector<16x32xf32>
    %170 = arith.mulf %169, %169 : vector<16x32xf32>
    %cst_51 = arith.constant dense<0.000000e+00> : vector<16xf32>
    %171 = vector.multi_reduction <add>, %170, %cst_51 [1] : vector<16x32xf32> to vector<16xf32>
    %172 = vector.shape_cast %171 : vector<16xf32> to vector<16x1xf32>
    %cst_52 = arith.constant 3.200000e+01 : f32
    %173 = vector.broadcast %cst_52 : f32 to vector<16x1xf32>
    %174 = arith.divf %172, %173 : vector<16x1xf32>
    %175 = vector.broadcast %167 : vector<16x1xf32> to vector<16x32xf32>
    %176 = arith.subf %161, %175 : vector<16x32xf32>
    %cst_53 = arith.constant 9.99999996E-13 : f32
    %177 = vector.broadcast %cst_53 : f32 to vector<16x1xf32>
    %178 = arith.addf %174, %177 : vector<16x1xf32>
    %179 = math.rsqrt %178 : vector<16x1xf32>
    %180 = vector.broadcast %179 : vector<16x1xf32> to vector<16x32xf32>
    %181 = arith.mulf %176, %180 : vector<16x32xf32>
    %182 = vector.broadcast %162 : vector<1x32xf32> to vector<16x32xf32>
    %183 = arith.mulf %181, %182 : vector<16x32xf32>
    %184 = vector.broadcast %163 : vector<1x32xf32> to vector<16x32xf32>
    %185 = arith.addf %183, %184 : vector<16x32xf32>
    %186 = vector.extract_strided_slice %185 {offsets = [0, 0], sizes = [8, 32], strides = [1, 1]} : vector<16x32xf32> to vector<8x32xf32>
    %187 = vector.extract_strided_slice %185 {offsets = [8, 0], sizes = [8, 32], strides = [1, 1]} : vector<16x32xf32> to vector<8x32xf32>
    %188 = tpu.concatenate %186, %187 in 1 : vector<8x32xf32>, vector<8x32xf32> -> vector<8x64xf32>
    %c0_54 = arith.constant 0 : index
    %c0_55 = arith.constant 0 : index
    %189 = vector.load %arg5[%c0_54, %c0_55] : memref<8x64xf32, #tpu.memory_space<vmem>>, vector<8x64xf32>
    tpu.vector_store %arg5[%c0_54, %c0_55], %188 {strides = array<i32>} : memref<8x64xf32, #tpu.memory_space<vmem>>, vector<8x64xf32>,
    %190 = vector.extract_strided_slice %185 {offsets = [0, 0], sizes = [1, 32], strides = [1, 1]} : vector<16x32xf32> to vector<1x32xf32>
    %191 = vector.extract_strided_slice %185 {offsets = [8, 0], sizes = [1, 32], strides = [1, 1]} : vector<16x32xf32> to vector<1x32xf32>
    %192 = tpu.concatenate %190, %191 in 0 : vector<1x32xf32>, vector<1x32xf32> -> vector<2x32xf32>
    %c0_56 = arith.constant 0 : index
    %c256 = arith.constant 256 : index
    %193 = vector.load %arg3[%c0_56, %c256] : memref<32x288xf32, #tpu.memory_space<vmem>>, vector<32x32xf32>
    %cst_57 = arith.constant dense<0.000000e+00> : vector<2x32xf32>
    %194 = tpu.matmul %192, %193, %cst_57 {dimension_numbers = #tpu.dot_dimension_numbers<[1], [0], [0], [1], [0, 0, 1, 1], [], []>} : vector<2x32xf32>, vector<32x32xf32>, vector<2x32xf32> -> vector<2x32xf32>
    %c216 = arith.constant 216 : index
    %c0_58 = arith.constant 0 : index
    %195 = vector.load %arg2[%c216, %c0_58] : memref<217x32xf32, #tpu.memory_space<vmem>>, vector<1x32xf32>
    %196 = vector.broadcast %195 : vector<1x32xf32> to vector<2x32xf32>
    %197 = arith.addf %194, %196 : vector<2x32xf32>
    %198 = math.tanh %197 : vector<2x32xf32>
    %c0_59 = arith.constant 0 : index
    %c0_60 = arith.constant 0 : index
    %199 = vector.load %arg6[%c0_59, %c0_60] : memref<2x32xf32, #tpu.memory_space<vmem>>, vector<2x32xf32>
    tpu.vector_store %arg6[%c0_59, %c0_60], %198 {strides = array<i32>} : memref<2x32xf32, #tpu.memory_space<vmem>>, vector<2x32xf32>,
    return
  }
}

</mosaic_0001>

<llo_original>
// kernel: bert_encoder.1
$region0: #{bert_encoder.1}
  #allocation0 [shape = 'u32[]', space=smem, size = 0x4, offset = 0x4, fixed_abs, tag = 'smem constant byte address 0x4 - core index']
  #allocation1 [shape = 'u32[144,128]{1,0:T(1,128)}', space=vmem, size = 0x12000, scoped, tag = 'internal scratch']
  %s0 = inlined_call_operand.vmem [shape: s32[16,1], index: 0, kind: input, shape index: {}]
  %s1 = inlined_call_operand.vmem [shape: s32[1,16], index: 1, kind: input, shape index: {}]
  %s2 = inlined_call_operand.hbm [shape: f32[217,32], index: 2, kind: input, shape index: {}]
  %s3 = inlined_call_operand.hbm [shape: f32[32,288], index: 3, kind: input, shape index: {}]
  %s4 = inlined_call_operand.vmem [shape: f32[1,224], index: 4, kind: input, shape index: {}]
  %s5 = inlined_call_operand.vmem [shape: f32[8,64], index: 5, kind: output, shape index: {0}]
  %s6 = inlined_call_operand.hbm [shape: f32[2,32], index: 6, kind: output, shape index: {1}]
  %7 = xla_tuple %s5, %s6
  %s8 = sld [smem:[#allocation0]]
  $region46: #{bert_encoder.1} parent=0
    _
  %s10 = ssub.s32 1, %s8
  %s11 = scalar_select 0, %s10, %s8
  $region1: #{bert_encoder.1} parent=0
    #allocation2 [shape = 'u8[114688]{0}', space=vmem, size = 0x1c000, scoped, tag = 'input window, operand 2, single buffered']
    #allocation3 [shape = 's32[1]{0}', space=sflag, size = 0x4, scoped, tag = 'scoped memory for bert_encoder.1']
    #allocation4 [shape = 's32[1]{0}', space=sflag, size = 0x4, scoped, tag = 'scoped memory for bert_encoder.1']
    #allocation5 [shape = 'u8[49152]{0}', space=vmem, size = 0xc000, scoped, tag = 'input window, operand 3, single buffered']
    #allocation6 [shape = 's32[1]{0}', space=sflag, size = 0x4, scoped, tag = 'scoped memory for bert_encoder.1']
    #allocation7 [shape = 'u8[1024]{0}', space=vmem, size = 0x400, scoped, tag = 'output window, operand 1, single buffered']
    %12 = vsyncpa [#allocation3], 0
    %13 = vsyncpa [#allocation6], 0
    %14 = vsyncpa [#allocation4], 0
    // Predicated region
    $region2: #{bert_encoder.1} parent=1 // pred_check
      _
    $region3: #{bert_encoder.1} parent=1 // pred_check_branch
      %16 = sbr.rel (0) target = $region5
    $region4: #{bert_encoder.1} parent=1 // pred_region
      _
    $region5: #{bert_encoder.1} parent=1 // pred_fallthru
      _
    // Predicated region
    $region6: #{bert_encoder.1} parent=1 // pred_check
      _
    $region7: #{bert_encoder.1} parent=1 // pred_check_branch
      %18 = sbr.rel (0) target = $region9
    $region8: #{bert_encoder.1} parent=1 // pred_region
      _
    $region9: #{bert_encoder.1} parent=1 // pred_fallthru
      _
    // Predicated region
    $region10: #{bert_encoder.1} parent=1 // pred_check
      _
    $region11: #{bert_encoder.1} parent=1 // pred_check_branch
      %20 = sbr.rel (0) target = $region13
    $region12: #{bert_encoder.1} parent=1 // pred_region
      %s22 = ssub.s32 3584, 3584
      %23 = vsyncadd [#allocation3], %s22
      %s24 = sshll.u32 [#allocation2], 4
      %s25 = int_to_ptr.vmem [resolvable:$true] %s24
      %30 = dma.hbm_to_vmem [thread:$0]  %s2, 3584, %s25, [#allocation3], 128, 128, 8
    $region13: #{bert_encoder.1} parent=1 // pred_fallthru
      _
    // Predicated region
    $region14: #{bert_encoder.1} parent=1 // pred_check
      _
    $region15: #{bert_encoder.1} parent=1 // pred_check_branch
      %32 = sbr.rel (0) target = $region17
    $region16: #{bert_encoder.1} parent=1 // pred_region
      %s34 = ssub.s32 1536, 1536
      %35 = vsyncadd [#allocation6], %s34
      %s36 = sshll.u32 [#allocation5], 4
      %s37 = int_to_ptr.vmem [resolvable:$true] %s36
      %42 = dma.hbm_to_vmem [thread:$0]  %s3, 1536, %s37, [#allocation6], 384, 384, 24
    $region17: #{bert_encoder.1} parent=1 // pred_fallthru
      _
    // Predicated region
    $region18: #{bert_encoder.1} parent=1 // pred_check
      _
    $region19: #{bert_encoder.1} parent=1 // pred_check_branch
      %44 = sbr.rel (0) target = $region21
    $region20: #{bert_encoder.1} parent=1 // pred_region
      _
    $region21: #{bert_encoder.1} parent=1 // pred_fallthru
      _
    // Predicated region
    $region22: #{bert_encoder.1} parent=1 // pred_check
      _
    $region23: #{bert_encoder.1} parent=1 // pred_check_branch
      %46 = sbr.rel (0) target = $region25
    $region24: #{bert_encoder.1} parent=1 // pred_region
      %47 = dma.done [#allocation3], 3584
    $region25: #{bert_encoder.1} parent=1 // pred_fallthru
      _
    // Predicated region
    $region26: #{bert_encoder.1} parent=1 // pred_check
      _
    $region27: #{bert_encoder.1} parent=1 // pred_check_branch
      %49 = sbr.rel (0) target = $region29
    $region28: #{bert_encoder.1} parent=1 // pred_region
      %50 = dma.done [#allocation6], 1536
    $region29: #{bert_encoder.1} parent=1 // pred_fallthru
      _
    %v51 = vld [vmem:[%s0] sm:$0xff]
    %v52 = vld [vmem:[%s0 + $0x8] sm:$0xff]
    %v53 = vlaneseq
    %v54 = vand.u32 %v53, 127
    %55 = vset.pattern.permute.xlu0 0
    %56 = vperm.xlu0 %55, %v51
    %v57 = vpop.permute.xlu0 %56
    %58 = vset.pattern.permute.xlu0 0
    %59 = vperm.xlu0 %58, %v52
    %v60 = vpop.permute.xlu0 %59
    %vm61 = vcmp.eq.s32.totalorder %v54, %v57
    %vm62 = vcmp.eq.s32.totalorder %v54, %v60
    %v63 = vsel %vm61, 1, 0
    %v64 = vsel %vm62, 1, 0
    %v65 = vcvt.s32.f32 %v63
    %v66 = vcvt.s32.f32 %v64
    %v67 = vld [vmem:[#allocation2] sm:$0xff]
    %v68 = vld [vmem:[#allocation2 + $0x8] sm:$0xff]
    %v69 = vld [vmem:[#allocation2 + $0x10] sm:$0xff]
    %v70 = vld [vmem:[#allocation2 + $0x18] sm:$0xff]
    %v71 = vld [vmem:[#allocation2 + $0x20] sm:$0xff]
    %v72 = vld [vmem:[#allocation2 + $0x28] sm:$0xff]
    %v73 = vld [vmem:[#allocation2 + $0x30] sm:$0xff]
    %v74 = vld [vmem:[#allocation2 + $0x38] sm:$0xff]
    %v75 = vld [vmem:[#allocation2 + $0x40] sm:$0xff]
    %v76 = vld [vmem:[#allocation2 + $0x48] sm:$0xff]
    %vm77 = vcmask 523264
    %v79 = vsel %vm77, %v65, 0
    %v82 = vsel %vm77, %v66, 0
    %84 = vmatprep.subr.mxu0 0.0
    %85 = vmatpush1.msra.mxu0 %v67
    %86 = vmatprep.subr.mxu0 0.0
    %87 = vmatpush1.msra.mxu0 %v68
    %88 = vmatprep.subr.mxu0 0.0
    %89 = vmatpush1.msra.mxu0 %v69
    %90 = vmatprep.subr.mxu0 0.0
    %91 = vmatpush1.msra.mxu0 %v70
    %92 = vmatprep.subr.mxu0 0.0
    %93 = vmatpush1.msra.mxu0 %v71
    %94 = vmatprep.subr.mxu0 0.0
    %95 = vmatpush1.msra.mxu0 %v72
    %96 = vmatprep.subr.mxu0 0.0
    %97 = vmatpush1.msra.mxu0 %v73
    %98 = vmatprep.subr.mxu0 0.0
    %99 = vmatpush1.msra.mxu0 %v74
    %100 = vmatprep.subr.mxu0 0.0
    %101 = vmatpush1.msra.mxu0 0.0
    %102 = vmatprep.subr.mxu0 0.0
    %103 = vmatpush1.msra.mxu0 0.0
    %104 = vmatprep.subr.mxu0 0.0
    %105 = vmatpush1.msra.mxu0 0.0
    %106 = vmatprep.subr.mxu0 0.0
    %107 = vmatpush1.msra.mxu0 0.0
    %108 = vmatprep.subr.mxu0 0.0
    %109 = vmatpush1.msra.mxu0 0.0
    %110 = vmatprep.subr.mxu0 0.0
    %111 = vmatpush1.msra.mxu0 0.0
    %112 = vmatprep.subr.mxu0 0.0
    %113 = vmatpush1.msra.mxu0 0.0
    %114 = vmatprep.subr.mxu0 0.0
    %115 = vmatpush1.msra.mxu0 0.0
    %116 = vmatprep.subr.mxu0 0.0
    %117 = vmatpush1.msra.mxu0 0.0
    %118 = vmatprep.subr.mxu0 0.0
    %119 = vmatpush1.msra.mxu0 0.0
    %120 = vmatprep.subr.mxu0 0.0
    %121 = vmatpush1.msra.mxu0 0.0
    %122 = vmatprep.subr.mxu0 0.0
    %123 = vmatpush1.msra.mxu0 0.0
    %124 = vmatprep.subr.mxu0 0.0
    %125 = vmatpush1.msra.mxu0 0.0
    %126 = vmatprep.subr.mxu0 0.0
    %127 = vmatpush1.msra.mxu0 0.0
    %128 = vmatprep.subr.mxu0 0.0
    %129 = vmatpush1.msra.mxu0 0.0
    %130 = vmatprep.subr.mxu0 0.0
    %131 = vmatpush1.msra.mxu0 0.0
    %132 = vmatprep.subr.mxu0 0.0
    %133 = vmatpush1.msra.mxu0 0.0
    %134 = vmatprep.subr.mxu0 0.0
    %135 = vmatpush1.msra.mxu0 0.0
    %136 = vmatprep.subr.mxu0 0.0
    %137 = vmatpush1.msra.mxu0 0.0
    %138 = vmatprep.subr.mxu0 0.0
    %139 = vmatpush1.msra.mxu0 0.0
    %140 = vmatprep.subr.mxu0 0.0
    %141 = vmatpush1.msra.mxu0 0.0
    %142 = vmatprep.subr.mxu0 0.0
    %143 = vmatpush1.msra.mxu0 0.0
    %144 = vmatprep.subr.mxu0 0.0
    %145 = vmatpush1.msra.mxu0 0.0
    %146 = vmatprep.subr.mxu0 0.0
    %147 = vmatpush1.msra.mxu0 0.0
    %148 = vmatprep.mubr.f32.mxu0 0.0
    %149 = vmatmul.mubr.f32.gmra.mrb[0].mxu0 %v79
    %v150 = vpop.f32.mrb[0].mxu0
    %v151 = vadd.f32 %v75, %v150
    %v152 = vpop.f32.mrb[0].mxu0
    %153 = vmatprep.mubr.f32.mxu0 0.0
    %154 = vmatmul.mubr.f32.gmra.mrb[0].mxu0 %v82
    %v155 = vpop.f32.mrb[0].mxu0
    %v156 = vadd.f32 %v76, %v155
    %v157 = vpop.f32.mrb[0].mxu0
    %158 = vdwg.mxu0
    %v159 = vld [vmem:[#allocation2 + $0xd0] sm:$0x1]
    %v160 = vld [vmem:[#allocation2 + $0xd1] sm:$0x1]
    %vm161 = vcmask 261120
    %v162 = vsel %vm161, %v151, 0.0
    %163 = vadd.xlane.f32.xlu0 %v162
    %v164 = vpop.xlane.xlu0 %163
    %v165 = vsel %vm161, %v156, 0.0
    %166 = vadd.xlane.f32.xlu0 %v165
    %v167 = vpop.xlane.xlu0 %166
    %v168 = vrcp.pop 32.0
    %v169 = vmul.f32 %v164, %v168
    %v170 = vmul.f32 %v167, %v168
    %v171 = vsub.f32 %v151, %v169
    %v172 = vsub.f32 %v156, %v170
    %v173 = vmul.f32 %v171, %v171
    %v174 = vmul.f32 %v172, %v172
    %v175 = vsel %vm161, %v173, 0.0
    %176 = vadd.xlane.f32.xlu0 %v175
    %v177 = vpop.xlane.xlu0 %176
    %v178 = vsel %vm161, %v174, 0.0
    %179 = vadd.xlane.f32.xlu0 %v178
    %v180 = vpop.xlane.xlu0 %179
    %v181 = vmul.f32 %v177, %v168
    %v182 = vmul.f32 %v180, %v168
    %v183 = vadd.f32 %v181, 1e-12
    %v184 = vadd.f32 %v182, 1e-12
    %v185 = vrsqrt.pop %v183
    %v186 = vrsqrt.pop %v184
    %v187 = vmul.f32 %v171, %v185
    %v188 = vmul.f32 %v172, %v186
    %v189 = vlaneseq
    %v190 = vshrl.u32 %v189, 7
    %v191 = vsub.s32 0, %v190
    %v192 = vrot.slane %v159, %v191
    %v193 = vmul.f32 %v187, %v192
    %v194 = vmul.f32 %v188, %v192
    %v195 = vlaneseq
    %v196 = vshrl.u32 %v195, 7
    %v197 = vsub.s32 0, %v196
    %v198 = vrot.slane %v160, %v197
    %v199 = vadd.f32 %v193, %v198
    %v200 = vadd.f32 %v194, %v198
    %v201 = vld [vmem:[%s1] sm:$0x1]
    %vm202 = vcmp.ne.s32.totalorder %v201, 0
    %v203 = vsel %vm202, 1, 0
    %v204 = vcvt.s32.f32 %v203
    %v205 = vlaneseq
    %v206 = vshrl.u32 %v205, 7
    %v207 = vadd.s32 %v206, 8
    %v208 = vxor.u32 %v206, %v54
    %v209 = vxor.u32 %v207, %v54
    %vm210 = vcmp.lt.s32.totalorder %v208, 8
    %vm211 = vcmp.lt.s32.totalorder %v209, 8
    %v212 = vsel %vm210, 0.0, -1e+09
    %v213 = vsel %vm211, 0.0, -1e+09
    %v214 = vsub.f32 1.0, %v204
    %v215 = vmul.f32 %v214, -1e+09
    %v217 = vlaneseq
    %v218 = vshrl.u32 %v217, 7
    %v219 = vsub.s32 0, %v218
    %v220 = vrot.slane %v215, %v219
    %v222 = vadd.f32 %v212, %v220
    %v223 = vadd.f32 %v213, %v220
    %v224 = vld [vmem:[#allocation5] sm:$0xff]
    %v225 = vld [vmem:[#allocation5 + $0x18] sm:$0xff]
    %v226 = vld [vmem:[#allocation5 + $0x30] sm:$0xff]
    %v227 = vld [vmem:[#allocation5 + $0x48] sm:$0xff]
    %v228 = vld [vmem:[%s4 + $0x1] sm:$0x1]
    %v230 = vlaneseq
    %v231 = vshrl.u32 %v230, 7
    %v232 = vsub.s32 0, %v231
    %v233 = vrot.slane %v228, %v232
    %v236 = vsel %vm161, %v199, 0
    %v239 = vsel %vm161, %v200, 0
    %241 = vmatprep.subr.mxu0 0.0
    %242 = vmatpush1.msra.mxu0 %v224
    %243 = vmatprep.subr.mxu0 0.0
    %244 = vmatpush1.msra.mxu0 %v225
    %245 = vmatprep.subr.mxu0 0.0
    %246 = vmatpush1.msra.mxu0 %v226
    %247 = vmatprep.subr.mxu0 0.0
    %248 = vmatpush1.msra.mxu0 %v227
    %249 = vmatprep.subr.mxu0 0.0
    %250 = vmatpush1.msra.mxu0 0.0
    %251 = vmatprep.subr.mxu0 0.0
    %252 = vmatpush1.msra.mxu0 0.0
    %253 = vmatprep.subr.mxu0 0.0
    %254 = vmatpush1.msra.mxu0 0.0
    %255 = vmatprep.subr.mxu0 0.0
    %256 = vmatpush1.msra.mxu0 0.0
    %257 = vmatprep.subr.mxu0 0.0
    %258 = vmatpush1.msra.mxu0 0.0
    %259 = vmatprep.subr.mxu0 0.0
    %260 = vmatpush1.msra.mxu0 0.0
    %261 = vmatprep.subr.mxu0 0.0
    %262 = vmatpush1.msra.mxu0 0.0
    %263 = vmatprep.subr.mxu0 0.0
    %264 = vmatpush1.msra.mxu0 0.0
    %265 = vmatprep.subr.mxu0 0.0
    %266 = vmatpush1.msra.mxu0 0.0
    %267 = vmatprep.subr.mxu0 0.0
    %268 = vmatpush1.msra.mxu0 0.0
    %269 = vmatprep.subr.mxu0 0.0
    %270 = vmatpush1.msra.mxu0 0.0
    %271 = vmatprep.subr.mxu0 0.0
    %272 = vmatpush1.msra.mxu0 0.0
    %273 = vmatprep.subr.mxu0 0.0
    %274 = vmatpush1.msra.mxu0 0.0
    %275 = vmatprep.subr.mxu0 0.0
    %276 = vmatpush1.msra.mxu0 0.0
    %277 = vmatprep.subr.mxu0 0.0
    %278 = vmatpush1.msra.mxu0 0.0
    %279 = vmatprep.subr.mxu0 0.0
    %280 = vmatpush1.msra.mxu0 0.0
    %281 = vmatprep.subr.mxu0 0.0
    %282 = vmatpush1.msra.mxu0 0.0
    %283 = vmatprep.subr.mxu0 0.0
    %284 = vmatpush1.msra.mxu0 0.0
    %285 = vmatprep.subr.mxu0 0.0
    %286 = vmatpush1.msra.mxu0 0.0
    %287 = vmatprep.subr.mxu0 0.0
    %288 = vmatpush1.msra.mxu0 0.0
    %289 = vmatprep.subr.mxu0 0.0
    %290 = vmatpush1.msra.mxu0 0.0
    %291 = vmatprep.subr.mxu0 0.0
    %292 = vmatpush1.msra.mxu0 0.0
    %293 = vmatprep.subr.mxu0 0.0
    %294 = vmatpush1.msra.mxu0 0.0
    %295 = vmatprep.subr.mxu0 0.0
    %296 = vmatpush1.msra.mxu0 0.0
    %297 = vmatprep.subr.mxu0 0.0
    %298 = vmatpush1.msra.mxu0 0.0
    %299 = vmatprep.subr.mxu0 0.0
    %300 = vmatpush1.msra.mxu0 0.0
    %301 = vmatprep.subr.mxu0 0.0
    %302 = vmatpush1.msra.mxu0 0.0
    %303 = vmatprep.subr.mxu0 0.0
    %304 = vmatpush1.msra.mxu0 0.0
    %305 = vmatprep.mubr.f32.mxu0 0.0
    %306 = vmatmul.mubr.f32.gmra.mrb[0].mxu0 %v236
    %v307 = vpop.f32.mrb[0].mxu0
    %v308 = vadd.f32 %v233, %v307
    %v309 = vpop.f32.mrb[0].mxu0
    %310 = vmatprep.mubr.f32.mxu0 0.0
    %311 = vmatmul.mubr.f32.gmra.mrb[0].mxu0 %v239
    %v312 = vpop.f32.mrb[0].mxu0
    %v313 = vadd.f32 %v233, %v312
    %v314 = vpop.f32.mrb[0].mxu0
    %315 = vdwg.mxu0
    %318 = vrot.lane.b32.xlu0 %v308, 120
    %v319 = vpop.permute.xlu0 %318
    %320 = vrot.lane.b32.xlu0 %v313, 120
    %v321 = vpop.permute.xlu0 %320
    %322 = vrot.lane.b32.xlu0 %v308, 112
    %v323 = vpop.permute.xlu0 %322
    %324 = vrot.lane.b32.xlu0 %v313, 112
    %v325 = vpop.permute.xlu0 %324
    %326 = vrot.lane.b32.xlu0 %v308, 104
    %v327 = vpop.permute.xlu0 %326
    %328 = vrot.lane.b32.xlu0 %v313, 104
    %v329 = vpop.permute.xlu0 %328
    %330 = vrot.lane.b32.xlu0 %v308, 96
    %v331 = vpop.permute.xlu0 %330
    %332 = vrot.lane.b32.xlu0 %v313, 96
    %v333 = vpop.permute.xlu0 %332
    %vm334 = vcmask 64512
    %v335 = vsel %vm334, %v308, 0
    %v337 = vsel %vm334, %v313, 0
    %v339 = vsel %vm334, %v331, 0
    %v341 = vsel %vm334, %v333, 0
    %343 = vmatprep.subr.mxu0 0.0
    %344 = vmatpush1.xpose.msra.mxu0 %v339
    %345 = vmatprep.subr.mxu0 0.0
    %346 = vmatpush1.xpose.msra.mxu0 %v341
    %347 = vmatprep.subr.mxu0 0.0
    %348 = vmatpush1.xpose.msra.mxu0 0.0
    %349 = vmatprep.subr.mxu0 0.0
    %350 = vmatpush1.xpose.msra.mxu0 0.0
    %351 = vmatprep.subr.mxu0 0.0
    %352 = vmatpush1.xpose.msra.mxu0 0.0
    %353 = vmatprep.subr.mxu0 0.0
    %354 = vmatpush1.xpose.msra.mxu0 0.0
    %355 = vmatprep.subr.mxu0 0.0
    %356 = vmatpush1.xpose.msra.mxu0 0.0
    %357 = vmatprep.subr.mxu0 0.0
    %358 = vmatpush1.xpose.msra.mxu0 0.0
    %359 = vmatprep.subr.mxu0 0.0
    %360 = vmatpush1.xpose.msra.mxu0 0.0
    %361 = vmatprep.subr.mxu0 0.0
    %362 = vmatpush1.xpose.msra.mxu0 0.0
    %363 = vmatprep.subr.mxu0 0.0
    %364 = vmatpush1.xpose.msra.mxu0 0.0
    %365 = vmatprep.subr.mxu0 0.0
    %366 = vmatpush1.xpose.msra.mxu0 0.0
    %367 = vmatprep.subr.mxu0 0.0
    %368 = vmatpush1.xpose.msra.mxu0 0.0
    %369 = vmatprep.subr.mxu0 0.0
    %370 = vmatpush1.xpose.msra.mxu0 0.0
    %371 = vmatprep.subr.mxu0 0.0
    %372 = vmatpush1.xpose.msra.mxu0 0.0
    %373 = vmatprep.subr.mxu0 0.0
    %374 = vmatpush1.xpose.msra.mxu0 0.0
    %375 = vmatprep.subr.mxu0 0.0
    %376 = vmatpush1.xpose.msra.mxu0 0.0
    %377 = vmatprep.subr.mxu0 0.0
    %378 = vmatpush1.xpose.msra.mxu0 0.0
    %379 = vmatprep.subr.mxu0 0.0
    %380 = vmatpush1.xpose.msra.mxu0 0.0
    %381 = vmatprep.subr.mxu0 0.0
    %382 = vmatpush1.xpose.msra.mxu0 0.0
    %383 = vmatprep.subr.mxu0 0.0
    %384 = vmatpush1.xpose.msra.mxu0 0.0
    %385 = vmatprep.subr.mxu0 0.0
    %386 = vmatpush1.xpose.msra.mxu0 0.0
    %387 = vmatprep.subr.mxu0 0.0
    %388 = vmatpush1.xpose.msra.mxu0 0.0
    %389 = vmatprep.subr.mxu0 0.0
    %390 = vmatpush1.xpose.msra.mxu0 0.0
    %391 = vmatprep.subr.mxu0 0.0
    %392 = vmatpush1.xpose.msra.mxu0 0.0
    %393 = vmatprep.subr.mxu0 0.0
    %394 = vmatpush1.xpose.msra.mxu0 0.0
    %395 = vmatprep.subr.mxu0 0.0
    %396 = vmatpush1.xpose.msra.mxu0 0.0
    %397 = vmatprep.subr.mxu0 0.0
    %398 = vmatpush1.xpose.msra.mxu0 0.0
    %399 = vmatprep.subr.mxu0 0.0
    %400 = vmatpush1.xpose.msra.mxu0 0.0
    %401 = vmatprep.subr.mxu0 0.0
    %402 = vmatpush1.xpose.msra.mxu0 0.0
    %403 = vmatprep.subr.mxu0 0.0
    %404 = vmatpush1.xpose.msra.mxu0 0.0
    %405 = vmatprep.subr.mxu0 0.0
    %406 = vmatpush1.xpose.msra.mxu0 0.0
    %407 = vmatprep.mubr.f32.mxu0 0.0
    %408 = vmatmul.mubr.f32.gmra.mrb[0].mxu0 %v335
    %v409 = vpop.f32.mrb[0].mxu0
    %v410 = vadd.f32 %v222, %v409
    %v411 = vpop.f32.mrb[0].mxu0
    %412 = vmatprep.mubr.f32.mxu0 0.0
    %413 = vmatmul.mubr.f32.gmra.mrb[0].mxu0 %v337
    %v414 = vpop.f32.mrb[0].mxu0
    %v415 = vadd.f32 %v223, %v414
    %v416 = vpop.f32.mrb[0].mxu0
    %417 = vdwg.mxu0
    %418 = vrot.lane.b32.xlu0 %v319, 96
    %v419 = vpop.permute.xlu0 %418
    %420 = vrot.lane.b32.xlu0 %v321, 96
    %v421 = vpop.permute.xlu0 %420
    %v422 = vsel %vm334, %v319, 0
    %v424 = vsel %vm334, %v321, 0
    %v426 = vsel %vm334, %v419, 0
    %v428 = vsel %vm334, %v421, 0
    %430 = vmatprep.subr.mxu0 0.0
    %431 = vmatpush1.xpose.msra.mxu0 %v426
    %432 = vmatprep.subr.mxu0 0.0
    %433 = vmatpush1.xpose.msra.mxu0 %v428
    %434 = vmatprep.subr.mxu0 0.0
    %435 = vmatpush1.xpose.msra.mxu0 0.0
    %436 = vmatprep.subr.mxu0 0.0
    %437 = vmatpush1.xpose.msra.mxu0 0.0
    %438 = vmatprep.subr.mxu0 0.0
    %439 = vmatpush1.xpose.msra.mxu0 0.0
    %440 = vmatprep.subr.mxu0 0.0
    %441 = vmatpush1.xpose.msra.mxu0 0.0
    %442 = vmatprep.subr.mxu0 0.0
    %443 = vmatpush1.xpose.msra.mxu0 0.0
    %444 = vmatprep.subr.mxu0 0.0
    %445 = vmatpush1.xpose.msra.mxu0 0.0
    %446 = vmatprep.subr.mxu0 0.0
    %447 = vmatpush1.xpose.msra.mxu0 0.0
    %448 = vmatprep.subr.mxu0 0.0
    %449 = vmatpush1.xpose.msra.mxu0 0.0
    %450 = vmatprep.subr.mxu0 0.0
    %451 = vmatpush1.xpose.msra.mxu0 0.0
    %452 = vmatprep.subr.mxu0 0.0
    %453 = vmatpush1.xpose.msra.mxu0 0.0
    %454 = vmatprep.subr.mxu0 0.0
    %455 = vmatpush1.xpose.msra.mxu0 0.0
    %456 = vmatprep.subr.mxu0 0.0
    %457 = vmatpush1.xpose.msra.mxu0 0.0
    %458 = vmatprep.subr.mxu0 0.0
    %459 = vmatpush1.xpose.msra.mxu0 0.0
    %460 = vmatprep.subr.mxu0 0.0
    %461 = vmatpush1.xpose.msra.mxu0 0.0
    %462 = vmatprep.subr.mxu0 0.0
    %463 = vmatpush1.xpose.msra.mxu0 0.0
    %464 = vmatprep.subr.mxu0 0.0
    %465 = vmatpush1.xpose.msra.mxu0 0.0
    %466 = vmatprep.subr.mxu0 0.0
    %467 = vmatpush1.xpose.msra.mxu0 0.0
    %468 = vmatprep.subr.mxu0 0.0
    %469 = vmatpush1.xpose.msra.mxu0 0.0
    %470 = vmatprep.subr.mxu0 0.0
    %471 = vmatpush1.xpose.msra.mxu0 0.0
    %472 = vmatprep.subr.mxu0 0.0
    %473 = vmatpush1.xpose.msra.mxu0 0.0
    %474 = vmatprep.subr.mxu0 0.0
    %475 = vmatpush1.xpose.msra.mxu0 0.0
    %476 = vmatprep.subr.mxu0 0.0
    %477 = vmatpush1.xpose.msra.mxu0 0.0
    %478 = vmatprep.subr.mxu0 0.0
    %479 = vmatpush1.xpose.msra.mxu0 0.0
    %480 = vmatprep.subr.mxu0 0.0
    %481 = vmatpush1.xpose.msra.mxu0 0.0
    %482 = vmatprep.subr.mxu0 0.0
    %483 = vmatpush1.xpose.msra.mxu0 0.0
    %484 = vmatprep.subr.mxu0 0.0
    %485 = vmatpush1.xpose.msra.mxu0 0.0
    %486 = vmatprep.subr.mxu0 0.0
    %487 = vmatpush1.xpose.msra.mxu0 0.0
    %488 = vmatprep.subr.mxu0 0.0
    %489 = vmatpush1.xpose.msra.mxu0 0.0
    %490 = vmatprep.subr.mxu0 0.0
    %491 = vmatpush1.xpose.msra.mxu0 0.0
    %492 = vmatprep.subr.mxu0 0.0
    %493 = vmatpush1.xpose.msra.mxu0 0.0
    %494 = vmatprep.mubr.f32.mxu0 0.0
    %495 = vmatmul.mubr.f32.gmra.mrb[0].mxu0 %v422
    %v496 = vpop.f32.mrb[0].mxu0
    %v497 = vadd.f32 %v222, %v496
    %v498 = vpop.f32.mrb[0].mxu0
    %499 = vmatprep.mubr.f32.mxu0 0.0
    %500 = vmatmul.mubr.f32.gmra.mrb[0].mxu0 %v424
    %v501 = vpop.f32.mrb[0].mxu0
    %v502 = vadd.f32 %v223, %v501
    %v503 = vpop.f32.mrb[0].mxu0
    %504 = vdwg.mxu0
    %505 = vrot.lane.b32.xlu0 %v323, 96
    %v506 = vpop.permute.xlu0 %505
    %507 = vrot.lane.b32.xlu0 %v325, 96
    %v508 = vpop.permute.xlu0 %507
    %v509 = vsel %vm334, %v323, 0
    %v511 = vsel %vm334, %v325, 0
    %v513 = vsel %vm334, %v506, 0
    %v515 = vsel %vm334, %v508, 0
    %517 = vmatprep.subr.mxu0 0.0
    %518 = vmatpush1.xpose.msra.mxu0 %v513
    %519 = vmatprep.subr.mxu0 0.0
    %520 = vmatpush1.xpose.msra.mxu0 %v515
    %521 = vmatprep.subr.mxu0 0.0
    %522 = vmatpush1.xpose.msra.mxu0 0.0
    %523 = vmatprep.subr.mxu0 0.0
    %524 = vmatpush1.xpose.msra.mxu0 0.0
    %525 = vmatprep.subr.mxu0 0.0
    %526 = vmatpush1.xpose.msra.mxu0 0.0
    %527 = vmatprep.subr.mxu0 0.0
    %528 = vmatpush1.xpose.msra.mxu0 0.0
    %529 = vmatprep.subr.mxu0 0.0
    %530 = vmatpush1.xpose.msra.mxu0 0.0
    %531 = vmatprep.subr.mxu0 0.0
    %532 = vmatpush1.xpose.msra.mxu0 0.0
    %533 = vmatprep.subr.mxu0 0.0
    %534 = vmatpush1.xpose.msra.mxu0 0.0
    %535 = vmatprep.subr.mxu0 0.0
    %536 = vmatpush1.xpose.msra.mxu0 0.0
    %537 = vmatprep.subr.mxu0 0.0
    %538 = vmatpush1.xpose.msra.mxu0 0.0
    %539 = vmatprep.subr.mxu0 0.0
    %540 = vmatpush1.xpose.msra.mxu0 0.0
    %541 = vmatprep.subr.mxu0 0.0
    %542 = vmatpush1.xpose.msra.mxu0 0.0
    %543 = vmatprep.subr.mxu0 0.0
    %544 = vmatpush1.xpose.msra.mxu0 0.0
    %545 = vmatprep.subr.mxu0 0.0
    %546 = vmatpush1.xpose.msra.mxu0 0.0
    %547 = vmatprep.subr.mxu0 0.0
    %548 = vmatpush1.xpose.msra.mxu0 0.0
    %549 = vmatprep.subr.mxu0 0.0
    %550 = vmatpush1.xpose.msra.mxu0 0.0
    %551 = vmatprep.subr.mxu0 0.0
    %552 = vmatpush1.xpose.msra.mxu0 0.0
    %553 = vmatprep.subr.mxu0 0.0
    %554 = vmatpush1.xpose.msra.mxu0 0.0
    %555 = vmatprep.subr.mxu0 0.0
    %556 = vmatpush1.xpose.msra.mxu0 0.0
    %557 = vmatprep.subr.mxu0 0.0
    %558 = vmatpush1.xpose.msra.mxu0 0.0
    %559 = vmatprep.subr.mxu0 0.0
    %560 = vmatpush1.xpose.msra.mxu0 0.0
    %561 = vmatprep.subr.mxu0 0.0
    %562 = vmatpush1.xpose.msra.mxu0 0.0
    %563 = vmatprep.subr.mxu0 0.0
    %564 = vmatpush1.xpose.msra.mxu0 0.0
    %565 = vmatprep.subr.mxu0 0.0
    %566 = vmatpush1.xpose.msra.mxu0 0.0
    %567 = vmatprep.subr.mxu0 0.0
    %568 = vmatpush1.xpose.msra.mxu0 0.0
    %569 = vmatprep.subr.mxu0 0.0
    %570 = vmatpush1.xpose.msra.mxu0 0.0
    %571 = vmatprep.subr.mxu0 0.0
    %572 = vmatpush1.xpose.msra.mxu0 0.0
    %573 = vmatprep.subr.mxu0 0.0
    %574 = vmatpush1.xpose.msra.mxu0 0.0
    %575 = vmatprep.subr.mxu0 0.0
    %576 = vmatpush1.xpose.msra.mxu0 0.0
    %577 = vmatprep.subr.mxu0 0.0
    %578 = vmatpush1.xpose.msra.mxu0 0.0
    %579 = vmatprep.subr.mxu0 0.0
    %580 = vmatpush1.xpose.msra.mxu0 0.0
    %581 = vmatprep.mubr.f32.mxu0 0.0
    %582 = vmatmul.mubr.f32.gmra.mrb[0].mxu0 %v509
    %v583 = vpop.f32.mrb[0].mxu0
    %v584 = vadd.f32 %v222, %v583
    %v585 = vpop.f32.mrb[0].mxu0
    %586 = vmatprep.mubr.f32.mxu0 0.0
    %587 = vmatmul.mubr.f32.gmra.mrb[0].mxu0 %v511
    %v588 = vpop.f32.mrb[0].mxu0
    %v589 = vadd.f32 %v223, %v588
    %v590 = vpop.f32.mrb[0].mxu0
    %591 = vdwg.mxu0
    %592 = vrot.lane.b32.xlu0 %v327, 96
    %v593 = vpop.permute.xlu0 %592
    %594 = vrot.lane.b32.xlu0 %v329, 96
    %v595 = vpop.permute.xlu0 %594
    %v596 = vsel %vm334, %v327, 0
    %v598 = vsel %vm334, %v329, 0
    %v600 = vsel %vm334, %v593, 0
    %v602 = vsel %vm334, %v595, 0
    %604 = vmatprep.subr.mxu0 0.0
    %605 = vmatpush1.xpose.msra.mxu0 %v600
    %606 = vmatprep.subr.mxu0 0.0
    %607 = vmatpush1.xpose.msra.mxu0 %v602
    %608 = vmatprep.subr.mxu0 0.0
    %609 = vmatpush1.xpose.msra.mxu0 0.0
    %610 = vmatprep.subr.mxu0 0.0
    %611 = vmatpush1.xpose.msra.mxu0 0.0
    %612 = vmatprep.subr.mxu0 0.0
    %613 = vmatpush1.xpose.msra.mxu0 0.0
    %614 = vmatprep.subr.mxu0 0.0
    %615 = vmatpush1.xpose.msra.mxu0 0.0
    %616 = vmatprep.subr.mxu0 0.0
    %617 = vmatpush1.xpose.msra.mxu0 0.0
    %618 = vmatprep.subr.mxu0 0.0
    %619 = vmatpush1.xpose.msra.mxu0 0.0
    %620 = vmatprep.subr.mxu0 0.0
    %621 = vmatpush1.xpose.msra.mxu0 0.0
    %622 = vmatprep.subr.mxu0 0.0
    %623 = vmatpush1.xpose.msra.mxu0 0.0
    %624 = vmatprep.subr.mxu0 0.0
    %625 = vmatpush1.xpose.msra.mxu0 0.0
    %626 = vmatprep.subr.mxu0 0.0
    %627 = vmatpush1.xpose.msra.mxu0 0.0
    %628 = vmatprep.subr.mxu0 0.0
    %629 = vmatpush1.xpose.msra.mxu0 0.0
    %630 = vmatprep.subr.mxu0 0.0
    %631 = vmatpush1.xpose.msra.mxu0 0.0
    %632 = vmatprep.subr.mxu0 0.0
    %633 = vmatpush1.xpose.msra.mxu0 0.0
    %634 = vmatprep.subr.mxu0 0.0
    %635 = vmatpush1.xpose.msra.mxu0 0.0
    %636 = vmatprep.subr.mxu0 0.0
    %637 = vmatpush1.xpose.msra.mxu0 0.0
    %638 = vmatprep.subr.mxu0 0.0
    %639 = vmatpush1.xpose.msra.mxu0 0.0
    %640 = vmatprep.subr.mxu0 0.0
    %641 = vmatpush1.xpose.msra.mxu0 0.0
    %642 = vmatprep.subr.mxu0 0.0
    %643 = vmatpush1.xpose.msra.mxu0 0.0
    %644 = vmatprep.subr.mxu0 0.0
    %645 = vmatpush1.xpose.msra.mxu0 0.0
    %646 = vmatprep.subr.mxu0 0.0
    %647 = vmatpush1.xpose.msra.mxu0 0.0
    %648 = vmatprep.subr.mxu0 0.0
    %649 = vmatpush1.xpose.msra.mxu0 0.0
    %650 = vmatprep.subr.mxu0 0.0
    %651 = vmatpush1.xpose.msra.mxu0 0.0
    %652 = vmatprep.subr.mxu0 0.0
    %653 = vmatpush1.xpose.msra.mxu0 0.0
    %654 = vmatprep.subr.mxu0 0.0
    %655 = vmatpush1.xpose.msra.mxu0 0.0
    %656 = vmatprep.subr.mxu0 0.0
    %657 = vmatpush1.xpose.msra.mxu0 0.0
    %658 = vmatprep.subr.mxu0 0.0
    %659 = vmatpush1.xpose.msra.mxu0 0.0
    %660 = vmatprep.subr.mxu0 0.0
    %661 = vmatpush1.xpose.msra.mxu0 0.0
    %662 = vmatprep.subr.mxu0 0.0
    %663 = vmatpush1.xpose.msra.mxu0 0.0
    %664 = vmatprep.subr.mxu0 0.0
    %665 = vmatpush1.xpose.msra.mxu0 0.0
    %666 = vmatprep.subr.mxu0 0.0
    %667 = vmatpush1.xpose.msra.mxu0 0.0
    %668 = vmatprep.mubr.f32.mxu0 0.0
    %669 = vmatmul.mubr.f32.gmra.mrb[0].mxu0 %v596
    %v670 = vpop.f32.mrb[0].mxu0
    %v671 = vadd.f32 %v222, %v670
    %v672 = vpop.f32.mrb[0].mxu0
    %673 = vmatprep.mubr.f32.mxu0 0.0
    %674 = vmatmul.mubr.f32.gmra.mrb[0].mxu0 %v598
    %v675 = vpop.f32.mrb[0].mxu0
    %v676 = vadd.f32 %v223, %v675
    %v677 = vpop.f32.mrb[0].mxu0
    %678 = vdwg.mxu0
    %vm679 = vcmask 130048
    %v680 = vsel %vm679, %v410, -inf
    %681 = vmax.xlane.f32.xlu0 %v680
    %v682 = vpop.xlane.xlu0 %681
    %v683 = vsel %vm679, %v415, -inf
    %684 = vmax.xlane.f32.xlu0 %v683
    %v685 = vpop.xlane.xlu0 %684
    %v686 = vsel %vm679, %v497, -inf
    %687 = vmax.xlane.f32.xlu0 %v686
    %v688 = vpop.xlane.xlu0 %687
    %v689 = vsel %vm679, %v502, -inf
    %690 = vmax.xlane.f32.xlu0 %v689
    %v691 = vpop.xlane.xlu0 %690
    %v692 = vsel %vm679, %v584, -inf
    %693 = vmax.xlane.f32.xlu0 %v692
    %v694 = vpop.xlane.xlu0 %693
    %v695 = vsel %vm679, %v589, -inf
    %696 = vmax.xlane.f32.xlu0 %v695
    %v697 = vpop.xlane.xlu0 %696
    %v698 = vsel %vm679, %v671, -inf
    %699 = vmax.xlane.f32.xlu0 %v698
    %v700 = vpop.xlane.xlu0 %699
    %v701 = vsel %vm679, %v676, -inf
    %702 = vmax.xlane.f32.xlu0 %v701
    %v703 = vpop.xlane.xlu0 %702
    %v704 = vsub.f32 %v410, %v682
    %v705 = vsub.f32 %v415, %v685
    %v706 = vsub.f32 %v497, %v688
    %v707 = vsub.f32 %v502, %v691
    %v708 = vsub.f32 %v584, %v694
    %v709 = vsub.f32 %v589, %v697
    %v710 = vsub.f32 %v671, %v700
    %v711 = vsub.f32 %v676, %v703
    %v712 = vmul.f32 %v704, 1.442695
    %v713 = vpow.pop %v712
    %v714 = vmul.f32 %v705, 1.442695
    %v715 = vpow.pop %v714
    %v716 = vmul.f32 %v706, 1.442695
    %v717 = vpow.pop %v716
    %v718 = vmul.f32 %v707, 1.442695
    %v719 = vpow.pop %v718
    %v720 = vmul.f32 %v708, 1.442695
    %v721 = vpow.pop %v720
    %v722 = vmul.f32 %v709, 1.442695
    %v723 = vpow.pop %v722
    %v724 = vmul.f32 %v710, 1.442695
    %v725 = vpow.pop %v724
    %v726 = vmul.f32 %v711, 1.442695
    %v727 = vpow.pop %v726
    %v728 = vsel %vm679, %v713, 0.0
    %729 = vadd.xlane.f32.xlu0 %v728
    %v730 = vpop.xlane.xlu0 %729
    %v731 = vsel %vm679, %v715, 0.0
    %732 = vadd.xlane.f32.xlu0 %v731
    %v733 = vpop.xlane.xlu0 %732
    %v734 = vsel %vm679, %v717, 0.0
    %735 = vadd.xlane.f32.xlu0 %v734
    %v736 = vpop.xlane.xlu0 %735
    %v737 = vsel %vm679, %v719, 0.0
    %738 = vadd.xlane.f32.xlu0 %v737
    %v739 = vpop.xlane.xlu0 %738
    %v740 = vsel %vm679, %v721, 0.0
    %741 = vadd.xlane.f32.xlu0 %v740
    %v742 = vpop.xlane.xlu0 %741
    %v743 = vsel %vm679, %v723, 0.0
    %744 = vadd.xlane.f32.xlu0 %v743
    %v745 = vpop.xlane.xlu0 %744
    %v746 = vsel %vm679, %v725, 0.0
    %747 = vadd.xlane.f32.xlu0 %v746
    %v748 = vpop.xlane.xlu0 %747
    %v749 = vsel %vm679, %v727, 0.0
    %750 = vadd.xlane.f32.xlu0 %v749
    %v751 = vpop.xlane.xlu0 %750
    %v752 = vrcp.pop %v730
    %v753 = vmul.f32 %v713, %v752
    %v754 = vrcp.pop %v733
    %v755 = vmul.f32 %v715, %v754
    %v756 = vrcp.pop %v736
    %v757 = vmul.f32 %v717, %v756
    %v758 = vrcp.pop %v739
    %v759 = vmul.f32 %v719, %v758
    %v760 = vrcp.pop %v742
    %v761 = vmul.f32 %v721, %v760
    %v762 = vrcp.pop %v745
    %v763 = vmul.f32 %v723, %v762
    %v764 = vrcp.pop %v748
    %v765 = vmul.f32 %v725, %v764
    %v766 = vrcp.pop %v751
    %v767 = vmul.f32 %v727, %v766
    %768 = vrot.lane.b32.xlu0 %v308, 64
    %v769 = vpop.permute.xlu0 %768
    %770 = vrot.lane.b32.xlu0 %v313, 64
    %v771 = vpop.permute.xlu0 %770
    %v775 = vsel %vm679, %v753, 0
    %v778 = vsel %vm679, %v755, 0
    %780 = vmatprep.subr.mxu0 0.0
    %781 = vmatpush1.msra.mxu0 %v769
    %782 = vmatprep.subr.mxu0 0.0
    %783 = vmatpush1.msra.mxu0 %v771
    %784 = vmatprep.subr.mxu0 0.0
    %785 = vmatpush1.msra.mxu0 0.0
    %786 = vmatprep.subr.mxu0 0.0
    %787 = vmatpush1.msra.mxu0 0.0
    %788 = vmatprep.subr.mxu0 0.0
    %789 = vmatpush1.msra.mxu0 0.0
    %790 = vmatprep.subr.mxu0 0.0
    %791 = vmatpush1.msra.mxu0 0.0
    %792 = vmatprep.subr.mxu0 0.0
    %793 = vmatpush1.msra.mxu0 0.0
    %794 = vmatprep.subr.mxu0 0.0
    %795 = vmatpush1.msra.mxu0 0.0
    %796 = vmatprep.subr.mxu0 0.0
    %797 = vmatpush1.msra.mxu0 0.0
    %798 = vmatprep.subr.mxu0 0.0
    %799 = vmatpush1.msra.mxu0 0.0
    %800 = vmatprep.subr.mxu0 0.0
    %801 = vmatpush1.msra.mxu0 0.0
    %802 = vmatprep.subr.mxu0 0.0
    %803 = vmatpush1.msra.mxu0 0.0
    %804 = vmatprep.subr.mxu0 0.0
    %805 = vmatpush1.msra.mxu0 0.0
    %806 = vmatprep.subr.mxu0 0.0
    %807 = vmatpush1.msra.mxu0 0.0
    %808 = vmatprep.subr.mxu0 0.0
    %809 = vmatpush1.msra.mxu0 0.0
    %810 = vmatprep.subr.mxu0 0.0
    %811 = vmatpush1.msra.mxu0 0.0
    %812 = vmatprep.subr.mxu0 0.0
    %813 = vmatpush1.msra.mxu0 0.0
    %814 = vmatprep.subr.mxu0 0.0
    %815 = vmatpush1.msra.mxu0 0.0
    %816 = vmatprep.subr.mxu0 0.0
    %817 = vmatpush1.msra.mxu0 0.0
    %818 = vmatprep.subr.mxu0 0.0
    %819 = vmatpush1.msra.mxu0 0.0
    %820 = vmatprep.subr.mxu0 0.0
    %821 = vmatpush1.msra.mxu0 0.0
    %822 = vmatprep.subr.mxu0 0.0
    %823 = vmatpush1.msra.mxu0 0.0
    %824 = vmatprep.subr.mxu0 0.0
    %825 = vmatpush1.msra.mxu0 0.0
    %826 = vmatprep.subr.mxu0 0.0
    %827 = vmatpush1.msra.mxu0 0.0
    %828 = vmatprep.subr.mxu0 0.0
    %829 = vmatpush1.msra.mxu0 0.0
    %830 = vmatprep.subr.mxu0 0.0
    %831 = vmatpush1.msra.mxu0 0.0
    %832 = vmatprep.subr.mxu0 0.0
    %833 = vmatpush1.msra.mxu0 0.0
    %834 = vmatprep.subr.mxu0 0.0
    %835 = vmatpush1.msra.mxu0 0.0
    %836 = vmatprep.subr.mxu0 0.0
    %837 = vmatpush1.msra.mxu0 0.0
    %838 = vmatprep.subr.mxu0 0.0
    %839 = vmatpush1.msra.mxu0 0.0
    %840 = vmatprep.subr.mxu0 0.0
    %841 = vmatpush1.msra.mxu0 0.0
    %842 = vmatprep.subr.mxu0 0.0
    %843 = vmatpush1.msra.mxu0 0.0
    %844 = vmatprep.mubr.f32.mxu0 0.0
    %845 = vmatmul.mubr.f32.gmra.mrb[0].mxu0 %v775
    %v846 = vpop.f32.mrb[0].mxu0
    %v847 = vadd.f32 0.0, %v846
    %v848 = vpop.f32.mrb[0].mxu0
    %849 = vmatprep.mubr.f32.mxu0 0.0
    %850 = vmatmul.mubr.f32.gmra.mrb[0].mxu0 %v778
    %v851 = vpop.f32.mrb[0].mxu0
    %v852 = vadd.f32 0.0, %v851
    %v853 = vpop.f32.mrb[0].mxu0
    %854 = vdwg.mxu0
    %855 = vrot.lane.b32.xlu0 %v319, 64
    %v856 = vpop.permute.xlu0 %855
    %857 = vrot.lane.b32.xlu0 %v321, 64
    %v858 = vpop.permute.xlu0 %857
    %v862 = vsel %vm679, %v757, 0
    %v865 = vsel %vm679, %v759, 0
    %867 = vmatprep.subr.mxu0 0.0
    %868 = vmatpush1.msra.mxu0 %v856
    %869 = vmatprep.subr.mxu0 0.0
    %870 = vmatpush1.msra.mxu0 %v858
    %871 = vmatprep.subr.mxu0 0.0
    %872 = vmatpush1.msra.mxu0 0.0
    %873 = vmatprep.subr.mxu0 0.0
    %874 = vmatpush1.msra.mxu0 0.0
    %875 = vmatprep.subr.mxu0 0.0
    %876 = vmatpush1.msra.mxu0 0.0
    %877 = vmatprep.subr.mxu0 0.0
    %878 = vmatpush1.msra.mxu0 0.0
    %879 = vmatprep.subr.mxu0 0.0
    %880 = vmatpush1.msra.mxu0 0.0
    %881 = vmatprep.subr.mxu0 0.0
    %882 = vmatpush1.msra.mxu0 0.0
    %883 = vmatprep.subr.mxu0 0.0
    %884 = vmatpush1.msra.mxu0 0.0
    %885 = vmatprep.subr.mxu0 0.0
    %886 = vmatpush1.msra.mxu0 0.0
    %887 = vmatprep.subr.mxu0 0.0
    %888 = vmatpush1.msra.mxu0 0.0
    %889 = vmatprep.subr.mxu0 0.0
    %890 = vmatpush1.msra.mxu0 0.0
    %891 = vmatprep.subr.mxu0 0.0
    %892 = vmatpush1.msra.mxu0 0.0
    %893 = vmatprep.subr.mxu0 0.0
    %894 = vmatpush1.msra.mxu0 0.0
    %895 = vmatprep.subr.mxu0 0.0
    %896 = vmatpush1.msra.mxu0 0.0
    %897 = vmatprep.subr.mxu0 0.0
    %898 = vmatpush1.msra.mxu0 0.0
    %899 = vmatprep.subr.mxu0 0.0
    %900 = vmatpush1.msra.mxu0 0.0
    %901 = vmatprep.subr.mxu0 0.0
    %902 = vmatpush1.msra.mxu0 0.0
    %903 = vmatprep.subr.mxu0 0.0
    %904 = vmatpush1.msra.mxu0 0.0
    %905 = vmatprep.subr.mxu0 0.0
    %906 = vmatpush1.msra.mxu0 0.0
    %907 = vmatprep.subr.mxu0 0.0
    %908 = vmatpush1.msra.mxu0 0.0
    %909 = vmatprep.subr.mxu0 0.0
    %910 = vmatpush1.msra.mxu0 0.0
    %911 = vmatprep.subr.mxu0 0.0
    %912 = vmatpush1.msra.mxu0 0.0
    %913 = vmatprep.subr.mxu0 0.0
    %914 = vmatpush1.msra.mxu0 0.0
    %915 = vmatprep.subr.mxu0 0.0
    %916 = vmatpush1.msra.mxu0 0.0
    %917 = vmatprep.subr.mxu0 0.0
    %918 = vmatpush1.msra.mxu0 0.0
    %919 = vmatprep.subr.mxu0 0.0
    %920 = vmatpush1.msra.mxu0 0.0
    %921 = vmatprep.subr.mxu0 0.0
    %922 = vmatpush1.msra.mxu0 0.0
    %923 = vmatprep.subr.mxu0 0.0
    %924 = vmatpush1.msra.mxu0 0.0
    %925 = vmatprep.subr.mxu0 0.0
    %926 = vmatpush1.msra.mxu0 0.0
    %927 = vmatprep.subr.mxu0 0.0
    %928 = vmatpush1.msra.mxu0 0.0
    %929 = vmatprep.subr.mxu0 0.0
    %930 = vmatpush1.msra.mxu0 0.0
    %931 = vmatprep.mubr.f32.mxu0 0.0
    %932 = vmatmul.mubr.f32.gmra.mrb[0].mxu0 %v862
    %v933 = vpop.f32.mrb[0].mxu0
    %v934 = vadd.f32 0.0, %v933
    %v935 = vpop.f32.mrb[0].mxu0
    %936 = vmatprep.mubr.f32.mxu0 0.0
    %937 = vmatmul.mubr.f32.gmra.mrb[0].mxu0 %v865
    %v938 = vpop.f32.mrb[0].mxu0
    %v939 = vadd.f32 0.0, %v938
    %v940 = vpop.f32.mrb[0].mxu0
    %941 = vdwg.mxu0
    %942 = vrot.lane.b32.xlu0 %v323, 64
    %v943 = vpop.permute.xlu0 %942
    %944 = vrot.lane.b32.xlu0 %v325, 64
    %v945 = vpop.permute.xlu0 %944
    %v949 = vsel %vm679, %v761, 0
    %v952 = vsel %vm679, %v763, 0
    %954 = vmatprep.subr.mxu0 0.0
    %955 = vmatpush1.msra.mxu0 %v943
    %956 = vmatprep.subr.mxu0 0.0
    %957 = vmatpush1.msra.mxu0 %v945
    %958 = vmatprep.subr.mxu0 0.0
    %959 = vmatpush1.msra.mxu0 0.0
    %960 = vmatprep.subr.mxu0 0.0
    %961 = vmatpush1.msra.mxu0 0.0
    %962 = vmatprep.subr.mxu0 0.0
    %963 = vmatpush1.msra.mxu0 0.0
    %964 = vmatprep.subr.mxu0 0.0
    %965 = vmatpush1.msra.mxu0 0.0
    %966 = vmatprep.subr.mxu0 0.0
    %967 = vmatpush1.msra.mxu0 0.0
    %968 = vmatprep.subr.mxu0 0.0
    %969 = vmatpush1.msra.mxu0 0.0
    %970 = vmatprep.subr.mxu0 0.0
    %971 = vmatpush1.msra.mxu0 0.0
    %972 = vmatprep.subr.mxu0 0.0
    %973 = vmatpush1.msra.mxu0 0.0
    %974 = vmatprep.subr.mxu0 0.0
    %975 = vmatpush1.msra.mxu0 0.0
    %976 = vmatprep.subr.mxu0 0.0
    %977 = vmatpush1.msra.mxu0 0.0
    %978 = vmatprep.subr.mxu0 0.0
    %979 = vmatpush1.msra.mxu0 0.0
    %980 = vmatprep.subr.mxu0 0.0
    %981 = vmatpush1.msra.mxu0 0.0
    %982 = vmatprep.subr.mxu0 0.0
    %983 = vmatpush1.msra.mxu0 0.0
    %984 = vmatprep.subr.mxu0 0.0
    %985 = vmatpush1.msra.mxu0 0.0
    %986 = vmatprep.subr.mxu0 0.0
    %987 = vmatpush1.msra.mxu0 0.0
    %988 = vmatprep.subr.mxu0 0.0
    %989 = vmatpush1.msra.mxu0 0.0
    %990 = vmatprep.subr.mxu0 0.0
    %991 = vmatpush1.msra.mxu0 0.0
    %992 = vmatprep.subr.mxu0 0.0
    %993 = vmatpush1.msra.mxu0 0.0
    %994 = vmatprep.subr.mxu0 0.0
    %995 = vmatpush1.msra.mxu0 0.0
    %996 = vmatprep.subr.mxu0 0.0
    %997 = vmatpush1.msra.mxu0 0.0
    %998 = vmatprep.subr.mxu0 0.0
    %999 = vmatpush1.msra.mxu0 0.0
    %1000 = vmatprep.subr.mxu0 0.0
    %1001 = vmatpush1.msra.mxu0 0.0
    %1002 = vmatprep.subr.mxu0 0.0
    %1003 = vmatpush1.msra.mxu0 0.0
    %1004 = vmatprep.subr.mxu0 0.0
    %1005 = vmatpush1.msra.mxu0 0.0
    %1006 = vmatprep.subr.mxu0 0.0
    %1007 = vmatpush1.msra.mxu0 0.0
    %1008 = vmatprep.subr.mxu0 0.0
    %1009 = vmatpush1.msra.mxu0 0.0
    %1010 = vmatprep.subr.mxu0 0.0
    %1011 = vmatpush1.msra.mxu0 0.0
    %1012 = vmatprep.subr.mxu0 0.0
    %1013 = vmatpush1.msra.mxu0 0.0
    %1014 = vmatprep.subr.mxu0 0.0
    %1015 = vmatpush1.msra.mxu0 0.0
    %1016 = vmatprep.subr.mxu0 0.0
    %1017 = vmatpush1.msra.mxu0 0.0
    %1018 = vmatprep.mubr.f32.mxu0 0.0
    %1019 = vmatmul.mubr.f32.gmra.mrb[0].mxu0 %v949
    %v1020 = vpop.f32.mrb[0].mxu0
    %v1021 = vadd.f32 0.0, %v1020
    %v1022 = vpop.f32.mrb[0].mxu0
    %1023 = vmatprep.mubr.f32.mxu0 0.0
    %1024 = vmatmul.mubr.f32.gmra.mrb[0].mxu0 %v952
    %v1025 = vpop.f32.mrb[0].mxu0
    %v1026 = vadd.f32 0.0, %v1025
    %v1027 = vpop.f32.mrb[0].mxu0
    %1028 = vdwg.mxu0
    %1029 = vrot.lane.b32.xlu0 %v327, 64
    %v1030 = vpop.permute.xlu0 %1029
    %1031 = vrot.lane.b32.xlu0 %v329, 64
    %v1032 = vpop.permute.xlu0 %1031
    %v1036 = vsel %vm679, %v765, 0
    %v1039 = vsel %vm679, %v767, 0
    %1041 = vmatprep.subr.mxu0 0.0
    %1042 = vmatpush1.msra.mxu0 %v1030
    %1043 = vmatprep.subr.mxu0 0.0
    %1044 = vmatpush1.msra.mxu0 %v1032
    %1045 = vmatprep.subr.mxu0 0.0
    %1046 = vmatpush1.msra.mxu0 0.0
    %1047 = vmatprep.subr.mxu0 0.0
    %1048 = vmatpush1.msra.mxu0 0.0
    %1049 = vmatprep.subr.mxu0 0.0
    %1050 = vmatpush1.msra.mxu0 0.0
    %1051 = vmatprep.subr.mxu0 0.0
    %1052 = vmatpush1.msra.mxu0 0.0
    %1053 = vmatprep.subr.mxu0 0.0
    %1054 = vmatpush1.msra.mxu0 0.0
    %1055 = vmatprep.subr.mxu0 0.0
    %1056 = vmatpush1.msra.mxu0 0.0
    %1057 = vmatprep.subr.mxu0 0.0
    %1058 = vmatpush1.msra.mxu0 0.0
    %1059 = vmatprep.subr.mxu0 0.0
    %1060 = vmatpush1.msra.mxu0 0.0
    %1061 = vmatprep.subr.mxu0 0.0
    %1062 = vmatpush1.msra.mxu0 0.0
    %1063 = vmatprep.subr.mxu0 0.0
    %1064 = vmatpush1.msra.mxu0 0.0
    %1065 = vmatprep.subr.mxu0 0.0
    %1066 = vmatpush1.msra.mxu0 0.0
    %1067 = vmatprep.subr.mxu0 0.0
    %1068 = vmatpush1.msra.mxu0 0.0
    %1069 = vmatprep.subr.mxu0 0.0
    %1070 = vmatpush1.msra.mxu0 0.0
    %1071 = vmatprep.subr.mxu0 0.0
    %1072 = vmatpush1.msra.mxu0 0.0
    %1073 = vmatprep.subr.mxu0 0.0
    %1074 = vmatpush1.msra.mxu0 0.0
    %1075 = vmatprep.subr.mxu0 0.0
    %1076 = vmatpush1.msra.mxu0 0.0
    %1077 = vmatprep.subr.mxu0 0.0
    %1078 = vmatpush1.msra.mxu0 0.0
    %1079 = vmatprep.subr.mxu0 0.0
    %1080 = vmatpush1.msra.mxu0 0.0
    %1081 = vmatprep.subr.mxu0 0.0
    %1082 = vmatpush1.msra.mxu0 0.0
    %1083 = vmatprep.subr.mxu0 0.0
    %1084 = vmatpush1.msra.mxu0 0.0
    %1085 = vmatprep.subr.mxu0 0.0
    %1086 = vmatpush1.msra.mxu0 0.0
    %1087 = vmatprep.subr.mxu0 0.0
    %1088 = vmatpush1.msra.mxu0 0.0
    %1089 = vmatprep.subr.mxu0 0.0
    %1090 = vmatpush1.msra.mxu0 0.0
    %1091 = vmatprep.subr.mxu0 0.0
    %1092 = vmatpush1.msra.mxu0 0.0
    %1093 = vmatprep.subr.mxu0 0.0
    %1094 = vmatpush1.msra.mxu0 0.0
    %1095 = vmatprep.subr.mxu0 0.0
    %1096 = vmatpush1.msra.mxu0 0.0
    %1097 = vmatprep.subr.mxu0 0.0
    %1098 = vmatpush1.msra.mxu0 0.0
    %1099 = vmatprep.subr.mxu0 0.0
    %1100 = vmatpush1.msra.mxu0 0.0
    %1101 = vmatprep.subr.mxu0 0.0
    %1102 = vmatpush1.msra.mxu0 0.0
    %1103 = vmatprep.subr.mxu0 0.0
    %1104 = vmatpush1.msra.mxu0 0.0
    %1105 = vmatprep.mubr.f32.mxu0 0.0
    %1106 = vmatmul.mubr.f32.gmra.mrb[0].mxu0 %v1036
    %v1107 = vpop.f32.mrb[0].mxu0
    %v1108 = vadd.f32 0.0, %v1107
    %v1109 = vpop.f32.mrb[0].mxu0
    %1110 = vmatprep.mubr.f32.mxu0 0.0
    %1111 = vmatmul.mubr.f32.gmra.mrb[0].mxu0 %v1039
    %v1112 = vpop.f32.mrb[0].mxu0
    %v1113 = vadd.f32 0.0, %v1112
    %v1114 = vpop.f32.mrb[0].mxu0
    %1115 = vdwg.mxu0
    %1118 = vrot.lane.b32.xlu0 %v934, 8
    %v1119 = vpop.permute.xlu0 %1118
    %1120 = vrot.lane.b32.xlu0 %v939, 8
    %v1121 = vpop.permute.xlu0 %1120
    %1126 = vrot.lane.b32.xlu0 %v1021, 16
    %v1127 = vpop.permute.xlu0 %1126
    %1128 = vrot.lane.b32.xlu0 %v1026, 16
    %v1129 = vpop.permute.xlu0 %1128
    %1134 = vrot.lane.b32.xlu0 %v1108, 24
    %v1135 = vpop.permute.xlu0 %1134
    %1136 = vrot.lane.b32.xlu0 %v1113, 24
    %v1137 = vpop.permute.xlu0 %1136
    %v1140 = vsel %vm334, %v847, %v1119
    %v1141 = vsel %vm334, %v852, %v1121
    %v1142 = vsel %vm679, %v1140, %v1127
    %v1143 = vsel %vm679, %v1141, %v1129
    %vm1144 = vcmask 195584
    %v1145 = vsel %vm1144, %v1142, %v1135
    %v1146 = vsel %vm1144, %v1143, %v1137
    %v1147 = vld [vmem:[#allocation5] sm:$0xff]
    %v1148 = vld [vmem:[#allocation5 + $0x18] sm:$0xff]
    %v1149 = vld [vmem:[#allocation5 + $0x30] sm:$0xff]
    %v1150 = vld [vmem:[#allocation5 + $0x48] sm:$0xff]
    %v1151 = vld [vmem:[#allocation2 + $0xd6] sm:$0x1]
    %v1152 = vlaneseq
    %v1153 = vshrl.u32 %v1152, 7
    %v1154 = vsub.s32 0, %v1153
    %v1155 = vrot.slane %v1151, %v1154
    %1160 = vrot.lane.b32.xlu0 %v1147, 32
    %v1161 = vpop.permute.xlu0 %1160
    %1162 = vrot.lane.b32.xlu0 %v1148, 32
    %v1163 = vpop.permute.xlu0 %1162
    %1164 = vrot.lane.b32.xlu0 %v1149, 32
    %v1165 = vpop.permute.xlu0 %1164
    %1166 = vrot.lane.b32.xlu0 %v1150, 32
    %v1167 = vpop.permute.xlu0 %1166
    %v1173 = vsel %vm161, %v1145, 0
    %v1176 = vsel %vm161, %v1146, 0
    %1178 = vmatprep.subr.mxu0 0.0
    %1179 = vmatpush1.msra.mxu0 %v1161
    %1180 = vmatprep.subr.mxu0 0.0
    %1181 = vmatpush1.msra.mxu0 %v1163
    %1182 = vmatprep.subr.mxu0 0.0
    %1183 = vmatpush1.msra.mxu0 %v1165
    %1184 = vmatprep.subr.mxu0 0.0
    %1185 = vmatpush1.msra.mxu0 %v1167
    %1186 = vmatprep.subr.mxu0 0.0
    %1187 = vmatpush1.msra.mxu0 0.0
    %1188 = vmatprep.subr.mxu0 0.0
    %1189 = vmatpush1.msra.mxu0 0.0
    %1190 = vmatprep.subr.mxu0 0.0
    %1191 = vmatpush1.msra.mxu0 0.0
    %1192 = vmatprep.subr.mxu0 0.0
    %1193 = vmatpush1.msra.mxu0 0.0
    %1194 = vmatprep.subr.mxu0 0.0
    %1195 = vmatpush1.msra.mxu0 0.0
    %1196 = vmatprep.subr.mxu0 0.0
    %1197 = vmatpush1.msra.mxu0 0.0
    %1198 = vmatprep.subr.mxu0 0.0
    %1199 = vmatpush1.msra.mxu0 0.0
    %1200 = vmatprep.subr.mxu0 0.0
    %1201 = vmatpush1.msra.mxu0 0.0
    %1202 = vmatprep.subr.mxu0 0.0
    %1203 = vmatpush1.msra.mxu0 0.0
    %1204 = vmatprep.subr.mxu0 0.0
    %1205 = vmatpush1.msra.mxu0 0.0
    %1206 = vmatprep.subr.mxu0 0.0
    %1207 = vmatpush1.msra.mxu0 0.0
    %1208 = vmatprep.subr.mxu0 0.0
    %1209 = vmatpush1.msra.mxu0 0.0
    %1210 = vmatprep.subr.mxu0 0.0
    %1211 = vmatpush1.msra.mxu0 0.0
    %1212 = vmatprep.subr.mxu0 0.0
    %1213 = vmatpush1.msra.mxu0 0.0
    %1214 = vmatprep.subr.mxu0 0.0
    %1215 = vmatpush1.msra.mxu0 0.0
    %1216 = vmatprep.subr.mxu0 0.0
    %1217 = vmatpush1.msra.mxu0 0.0
    %1218 = vmatprep.subr.mxu0 0.0
    %1219 = vmatpush1.msra.mxu0 0.0
    %1220 = vmatprep.subr.mxu0 0.0
    %1221 = vmatpush1.msra.mxu0 0.0
    %1222 = vmatprep.subr.mxu0 0.0
    %1223 = vmatpush1.msra.mxu0 0.0
    %1224 = vmatprep.subr.mxu0 0.0
    %1225 = vmatpush1.msra.mxu0 0.0
    %1226 = vmatprep.subr.mxu0 0.0
    %1227 = vmatpush1.msra.mxu0 0.0
    %1228 = vmatprep.subr.mxu0 0.0
    %1229 = vmatpush1.msra.mxu0 0.0
    %1230 = vmatprep.subr.mxu0 0.0
    %1231 = vmatpush1.msra.mxu0 0.0
    %1232 = vmatprep.subr.mxu0 0.0
    %1233 = vmatpush1.msra.mxu0 0.0
    %1234 = vmatprep.subr.mxu0 0.0
    %1235 = vmatpush1.msra.mxu0 0.0
    %1236 = vmatprep.subr.mxu0 0.0
    %1237 = vmatpush1.msra.mxu0 0.0
    %1238 = vmatprep.subr.mxu0 0.0
    %1239 = vmatpush1.msra.mxu0 0.0
    %1240 = vmatprep.subr.mxu0 0.0
    %1241 = vmatpush1.msra.mxu0 0.0
    %1242 = vmatprep.mubr.f32.mxu0 0.0
    %1243 = vmatmul.mubr.f32.gmra.mrb[0].mxu0 %v1173
    %v1244 = vpop.f32.mrb[0].mxu0
    %v1245 = vadd.f32 %v1155, %v1244
    %v1246 = vpop.f32.mrb[0].mxu0
    %1247 = vmatprep.mubr.f32.mxu0 0.0
    %1248 = vmatmul.mubr.f32.gmra.mrb[0].mxu0 %v1176
    %v1249 = vpop.f32.mrb[0].mxu0
    %v1250 = vadd.f32 %v1155, %v1249
    %v1251 = vpop.f32.mrb[0].mxu0
    %1252 = vdwg.mxu0
    %v1253 = vadd.f32 %v199, %v1245
    %v1254 = vadd.f32 %v200, %v1250
    %v1255 = vld [vmem:[#allocation2 + $0xd2] sm:$0x1]
    %v1256 = vld [vmem:[#allocation2 + $0xd3] sm:$0x1]
    %v1257 = vsel %vm161, %v1253, 0.0
    %1258 = vadd.xlane.f32.xlu0 %v1257
    %v1259 = vpop.xlane.xlu0 %1258
    %v1260 = vsel %vm161, %v1254, 0.0
    %1261 = vadd.xlane.f32.xlu0 %v1260
    %v1262 = vpop.xlane.xlu0 %1261
    %v1263 = vmul.f32 %v1259, %v168
    %v1264 = vmul.f32 %v1262, %v168
    %v1265 = vsub.f32 %v1253, %v1263
    %v1266 = vsub.f32 %v1254, %v1264
    %v1267 = vmul.f32 %v1265, %v1265
    %v1268 = vmul.f32 %v1266, %v1266
    %v1269 = vsel %vm161, %v1267, 0.0
    %1270 = vadd.xlane.f32.xlu0 %v1269
    %v1271 = vpop.xlane.xlu0 %1270
    %v1272 = vsel %vm161, %v1268, 0.0
    %1273 = vadd.xlane.f32.xlu0 %v1272
    %v1274 = vpop.xlane.xlu0 %1273
    %v1275 = vmul.f32 %v1271, %v168
    %v1276 = vmul.f32 %v1274, %v168
    %v1277 = vadd.f32 %v1275, 1e-12
    %v1278 = vadd.f32 %v1276, 1e-12
    %v1279 = vrsqrt.pop %v1277
    %v1280 = vrsqrt.pop %v1278
    %v1281 = vmul.f32 %v1265, %v1279
    %v1282 = vmul.f32 %v1266, %v1280
    %v1283 = vlaneseq
    %v1284 = vshrl.u32 %v1283, 7
    %v1285 = vsub.s32 0, %v1284
    %v1286 = vrot.slane %v1255, %v1285
    %v1287 = vmul.f32 %v1281, %v1286
    %v1288 = vmul.f32 %v1282, %v1286
    %v1289 = vlaneseq
    %v1290 = vshrl.u32 %v1289, 7
    %v1291 = vsub.s32 0, %v1290
    %v1292 = vrot.slane %v1256, %v1291
    %v1293 = vadd.f32 %v1287, %v1292
    %v1294 = vadd.f32 %v1288, %v1292
    %v1295 = vld [vmem:[#allocation5 + $0x8] sm:$0xff]
    %v1296 = vld [vmem:[#allocation5 + $0x20] sm:$0xff]
    %v1297 = vld [vmem:[#allocation5 + $0x38] sm:$0xff]
    %v1298 = vld [vmem:[#allocation5 + $0x50] sm:$0xff]
    %v1299 = vld [vmem:[%s4] sm:$0x1]
    %v1301 = vlaneseq
    %v1302 = vshrl.u32 %v1301, 7
    %v1303 = vsub.s32 0, %v1302
    %v1304 = vrot.slane %v1299, %v1303
    %v1307 = vsel %vm161, %v1293, 0
    %v1310 = vsel %vm161, %v1294, 0
    %1312 = vmatprep.subr.mxu0 0.0
    %1313 = vmatpush1.msra.mxu0 %v1295
    %1314 = vmatprep.subr.mxu0 0.0
    %1315 = vmatpush1.msra.mxu0 %v1296
    %1316 = vmatprep.subr.mxu0 0.0
    %1317 = vmatpush1.msra.mxu0 %v1297
    %1318 = vmatprep.subr.mxu0 0.0
    %1319 = vmatpush1.msra.mxu0 %v1298
    %1320 = vmatprep.subr.mxu0 0.0
    %1321 = vmatpush1.msra.mxu0 0.0
    %1322 = vmatprep.subr.mxu0 0.0
    %1323 = vmatpush1.msra.mxu0 0.0
    %1324 = vmatprep.subr.mxu0 0.0
    %1325 = vmatpush1.msra.mxu0 0.0
    %1326 = vmatprep.subr.mxu0 0.0
    %1327 = vmatpush1.msra.mxu0 0.0
    %1328 = vmatprep.subr.mxu0 0.0
    %1329 = vmatpush1.msra.mxu0 0.0
    %1330 = vmatprep.subr.mxu0 0.0
    %1331 = vmatpush1.msra.mxu0 0.0
    %1332 = vmatprep.subr.mxu0 0.0
    %1333 = vmatpush1.msra.mxu0 0.0
    %1334 = vmatprep.subr.mxu0 0.0
    %1335 = vmatpush1.msra.mxu0 0.0
    %1336 = vmatprep.subr.mxu0 0.0
    %1337 = vmatpush1.msra.mxu0 0.0
    %1338 = vmatprep.subr.mxu0 0.0
    %1339 = vmatpush1.msra.mxu0 0.0
    %1340 = vmatprep.subr.mxu0 0.0
    %1341 = vmatpush1.msra.mxu0 0.0
    %1342 = vmatprep.subr.mxu0 0.0
    %1343 = vmatpush1.msra.mxu0 0.0
    %1344 = vmatprep.subr.mxu0 0.0
    %1345 = vmatpush1.msra.mxu0 0.0
    %1346 = vmatprep.subr.mxu0 0.0
    %1347 = vmatpush1.msra.mxu0 0.0
    %1348 = vmatprep.subr.mxu0 0.0
    %1349 = vmatpush1.msra.mxu0 0.0
    %1350 = vmatprep.subr.mxu0 0.0
    %1351 = vmatpush1.msra.mxu0 0.0
    %1352 = vmatprep.subr.mxu0 0.0
    %1353 = vmatpush1.msra.mxu0 0.0
    %1354 = vmatprep.subr.mxu0 0.0
    %1355 = vmatpush1.msra.mxu0 0.0
    %1356 = vmatprep.subr.mxu0 0.0
    %1357 = vmatpush1.msra.mxu0 0.0
    %1358 = vmatprep.subr.mxu0 0.0
    %1359 = vmatpush1.msra.mxu0 0.0
    %1360 = vmatprep.subr.mxu0 0.0
    %1361 = vmatpush1.msra.mxu0 0.0
    %1362 = vmatprep.subr.mxu0 0.0
    %1363 = vmatpush1.msra.mxu0 0.0
    %1364 = vmatprep.subr.mxu0 0.0
    %1365 = vmatpush1.msra.mxu0 0.0
    %1366 = vmatprep.subr.mxu0 0.0
    %1367 = vmatpush1.msra.mxu0 0.0
    %1368 = vmatprep.subr.mxu0 0.0
    %1369 = vmatpush1.msra.mxu0 0.0
    %1370 = vmatprep.subr.mxu0 0.0
    %1371 = vmatpush1.msra.mxu0 0.0
    %1372 = vmatprep.subr.mxu0 0.0
    %1373 = vmatpush1.msra.mxu0 0.0
    %1374 = vmatprep.subr.mxu0 0.0
    %1375 = vmatpush1.msra.mxu0 0.0
    %1376 = vmatprep.mubr.f32.mxu0 0.0
    %1377 = vmatmul.mubr.f32.gmra.mrb[0].mxu0 %v1307
    %v1378 = vpop.f32.mrb[0].mxu0
    %v1379 = vadd.f32 %v1304, %v1378
    %v1380 = vpop.f32.mrb[0].mxu0
    %1381 = vmatprep.mubr.f32.mxu0 0.0
    %1382 = vmatmul.mubr.f32.gmra.mrb[0].mxu0 %v1310
    %v1383 = vpop.f32.mrb[0].mxu0
    %v1384 = vadd.f32 %v1304, %v1383
    %v1385 = vpop.f32.mrb[0].mxu0
    %1386 = vdwg.mxu0
    %v1387 = vmul.f32 %v1379, %v1379
    %v1388 = vmul.f32 %v1384, %v1384
    %v1389 = vmul.f32 %v1379, %v1387
    %v1390 = vmul.f32 %v1384, %v1388
    %v1391 = vmul.f32 %v1389, 0.044715
    %v1392 = vmul.f32 %v1390, 0.044715
    %v1393 = vadd.f32 %v1379, %v1391
    %v1394 = vadd.f32 %v1384, %v1392
    %v1395 = vmul.f32 %v1393, 0.7978846
    %v1396 = vmul.f32 %v1394, 0.7978846
    %v1397 = vtanh.pop %v1395
    %v1398 = vtanh.pop %v1396
    %v1399 = vadd.f32 %v1397, 1.0
    %v1400 = vadd.f32 %v1398, 1.0
    %v1401 = vmul.f32 %v1399, 0.5
    %v1402 = vmul.f32 %v1400, 0.5
    %v1403 = vmul.f32 %v1379, %v1401
    %v1404 = vmul.f32 %v1384, %v1402
    %v1405 = vld [vmem:[#allocation2 + $0x50] sm:$0xff]
    %v1406 = vld [vmem:[#allocation2 + $0x58] sm:$0xff]
    %v1407 = vld [vmem:[#allocation2 + $0x60] sm:$0xff]
    %v1408 = vld [vmem:[#allocation2 + $0x68] sm:$0xff]
    %v1409 = vld [vmem:[#allocation2 + $0x70] sm:$0xff]
    %v1410 = vld [vmem:[#allocation2 + $0x78] sm:$0xff]
    %v1411 = vld [vmem:[#allocation2 + $0x80] sm:$0xff]
    %v1412 = vld [vmem:[#allocation2 + $0x88] sm:$0xff]
    %v1413 = vld [vmem:[#allocation2 + $0x90] sm:$0xff]
    %v1414 = vld [vmem:[#allocation2 + $0x98] sm:$0xff]
    %v1415 = vld [vmem:[#allocation2 + $0xa0] sm:$0xff]
    %v1416 = vld [vmem:[#allocation2 + $0xa8] sm:$0xff]
    %v1417 = vld [vmem:[#allocation2 + $0xb0] sm:$0xff]
    %v1418 = vld [vmem:[#allocation2 + $0xb8] sm:$0xff]
    %v1419 = vld [vmem:[#allocation2 + $0xc0] sm:$0xff]
    %v1420 = vld [vmem:[#allocation2 + $0xc8] sm:$0xff]
    %v1421 = vld [vmem:[#allocation2 + $0xd7] sm:$0x1]
    %v1422 = vlaneseq
    %v1423 = vshrl.u32 %v1422, 7
    %v1424 = vsub.s32 0, %v1423
    %v1425 = vrot.slane %v1421, %v1424
    %1426 = vmatprep.subr.mxu0 0.0
    %1427 = vmatpush1.msra.mxu0 %v1405
    %1428 = vmatprep.subr.mxu0 0.0
    %1429 = vmatpush1.msra.mxu0 %v1406
    %1430 = vmatprep.subr.mxu0 0.0
    %1431 = vmatpush1.msra.mxu0 %v1407
    %1432 = vmatprep.subr.mxu0 0.0
    %1433 = vmatpush1.msra.mxu0 %v1408
    %1434 = vmatprep.subr.mxu0 0.0
    %1435 = vmatpush1.msra.mxu0 %v1409
    %1436 = vmatprep.subr.mxu0 0.0
    %1437 = vmatpush1.msra.mxu0 %v1410
    %1438 = vmatprep.subr.mxu0 0.0
    %1439 = vmatpush1.msra.mxu0 %v1411
    %1440 = vmatprep.subr.mxu0 0.0
    %1441 = vmatpush1.msra.mxu0 %v1412
    %1442 = vmatprep.subr.mxu0 0.0
    %1443 = vmatpush1.msra.mxu0 %v1413
    %1444 = vmatprep.subr.mxu0 0.0
    %1445 = vmatpush1.msra.mxu0 %v1414
    %1446 = vmatprep.subr.mxu0 0.0
    %1447 = vmatpush1.msra.mxu0 %v1415
    %1448 = vmatprep.subr.mxu0 0.0
    %1449 = vmatpush1.msra.mxu0 %v1416
    %1450 = vmatprep.subr.mxu0 0.0
    %1451 = vmatpush1.msra.mxu0 %v1417
    %1452 = vmatprep.subr.mxu0 0.0
    %1453 = vmatpush1.msra.mxu0 %v1418
    %1454 = vmatprep.subr.mxu0 0.0
    %1455 = vmatpush1.msra.mxu0 %v1419
    %1456 = vmatprep.subr.mxu0 0.0
    %1457 = vmatpush1.msra.mxu0 %v1420
    %1458 = vmatprep.subr.mxu0 0.0
    %1459 = vmatpush1.msra.mxu0 0.0
    %1460 = vmatprep.subr.mxu0 0.0
    %1461 = vmatpush1.msra.mxu0 0.0
    %1462 = vmatprep.subr.mxu0 0.0
    %1463 = vmatpush1.msra.mxu0 0.0
    %1464 = vmatprep.subr.mxu0 0.0
    %1465 = vmatpush1.msra.mxu0 0.0
    %1466 = vmatprep.subr.mxu0 0.0
    %1467 = vmatpush1.msra.mxu0 0.0
    %1468 = vmatprep.subr.mxu0 0.0
    %1469 = vmatpush1.msra.mxu0 0.0
    %1470 = vmatprep.subr.mxu0 0.0
    %1471 = vmatpush1.msra.mxu0 0.0
    %1472 = vmatprep.subr.mxu0 0.0
    %1473 = vmatpush1.msra.mxu0 0.0
    %1474 = vmatprep.subr.mxu0 0.0
    %1475 = vmatpush1.msra.mxu0 0.0
    %1476 = vmatprep.subr.mxu0 0.0
    %1477 = vmatpush1.msra.mxu0 0.0
    %1478 = vmatprep.subr.mxu0 0.0
    %1479 = vmatpush1.msra.mxu0 0.0
    %1480 = vmatprep.subr.mxu0 0.0
    %1481 = vmatpush1.msra.mxu0 0.0
    %1482 = vmatprep.subr.mxu0 0.0
    %1483 = vmatpush1.msra.mxu0 0.0
    %1484 = vmatprep.subr.mxu0 0.0
    %1485 = vmatpush1.msra.mxu0 0.0
    %1486 = vmatprep.subr.mxu0 0.0
    %1487 = vmatpush1.msra.mxu0 0.0
    %1488 = vmatprep.subr.mxu0 0.0
    %1489 = vmatpush1.msra.mxu0 0.0
    %1490 = vmatprep.mubr.f32.mxu0 0.0
    %1491 = vmatmul.mubr.f32.gmra.mrb[0].mxu0 %v1403
    %v1492 = vpop.f32.mrb[0].mxu0
    %v1493 = vadd.f32 %v1425, %v1492
    %v1494 = vpop.f32.mrb[0].mxu0
    %1495 = vmatprep.mubr.f32.mxu0 0.0
    %1496 = vmatmul.mubr.f32.gmra.mrb[0].mxu0 %v1404
    %v1497 = vpop.f32.mrb[0].mxu0
    %v1498 = vadd.f32 %v1425, %v1497
    %v1499 = vpop.f32.mrb[0].mxu0
    %1500 = vdwg.mxu0
    %v1501 = vadd.f32 %v1293, %v1493
    %v1502 = vadd.f32 %v1294, %v1498
    %v1503 = vld [vmem:[#allocation2 + $0xd4] sm:$0x1]
    %v1504 = vld [vmem:[#allocation2 + $0xd5] sm:$0x1]
    %v1505 = vsel %vm161, %v1501, 0.0
    %1506 = vadd.xlane.f32.xlu0 %v1505
    %v1507 = vpop.xlane.xlu0 %1506
    %v1508 = vsel %vm161, %v1502, 0.0
    %1509 = vadd.xlane.f32.xlu0 %v1508
    %v1510 = vpop.xlane.xlu0 %1509
    %v1511 = vmul.f32 %v1507, %v168
    %v1512 = vmul.f32 %v1510, %v168
    %v1513 = vsub.f32 %v1501, %v1511
    %v1514 = vsub.f32 %v1502, %v1512
    %v1515 = vmul.f32 %v1513, %v1513
    %v1516 = vmul.f32 %v1514, %v1514
    %v1517 = vsel %vm161, %v1515, 0.0
    %1518 = vadd.xlane.f32.xlu0 %v1517
    %v1519 = vpop.xlane.xlu0 %1518
    %v1520 = vsel %vm161, %v1516, 0.0
    %1521 = vadd.xlane.f32.xlu0 %v1520
    %v1522 = vpop.xlane.xlu0 %1521
    %v1523 = vmul.f32 %v1519, %v168
    %v1524 = vmul.f32 %v1522, %v168
    %v1525 = vadd.f32 %v1523, 1e-12
    %v1526 = vadd.f32 %v1524, 1e-12
    %v1527 = vrsqrt.pop %v1525
    %v1528 = vrsqrt.pop %v1526
    %v1529 = vmul.f32 %v1513, %v1527
    %v1530 = vmul.f32 %v1514, %v1528
    %v1531 = vlaneseq
    %v1532 = vshrl.u32 %v1531, 7
    %v1533 = vsub.s32 0, %v1532
    %v1534 = vrot.slane %v1503, %v1533
    %v1535 = vmul.f32 %v1529, %v1534
    %v1536 = vmul.f32 %v1530, %v1534
    %v1537 = vlaneseq
    %v1538 = vshrl.u32 %v1537, 7
    %v1539 = vsub.s32 0, %v1538
    %v1540 = vrot.slane %v1504, %v1539
    %v1541 = vadd.f32 %v1535, %v1540
    %v1542 = vadd.f32 %v1536, %v1540
    %1544 = vrot.lane.b32.xlu0 %v1542, 32
    %v1545 = vpop.permute.xlu0 %1544
    %v1547 = vsel %vm161, %v1541, %v1545
    %1548 = vst.msk [vmem:[%s5] sm:$0xff] %vm77, %v1547
    %v1549 = vrot.slane %v1542, 7
    %vm1551 = vcmask 1040384
    %v1552 = vsel %vm1551, %v1541, %v1549
    %v1553 = vld [vmem:[#allocation5 + $0x10] sm:$0xff]
    %v1554 = vld [vmem:[#allocation5 + $0x28] sm:$0xff]
    %v1555 = vld [vmem:[#allocation5 + $0x40] sm:$0xff]
    %v1556 = vld [vmem:[#allocation5 + $0x58] sm:$0xff]
    %v1557 = vld [vmem:[#allocation2 + $0xd8] sm:$0x1]
    %v1558 = vlaneseq
    %v1559 = vshrl.u32 %v1558, 7
    %v1560 = vsub.s32 0, %v1559
    %v1561 = vrot.slane %v1557, %v1560
    %v1563 = vsel %vm161, %v1552, 0
    %1565 = vmatprep.subr.mxu0 0.0
    %1566 = vmatpush1.msra.mxu0 %v1553
    %1567 = vmatprep.subr.mxu0 0.0
    %1568 = vmatpush1.msra.mxu0 %v1554
    %1569 = vmatprep.subr.mxu0 0.0
    %1570 = vmatpush1.msra.mxu0 %v1555
    %1571 = vmatprep.subr.mxu0 0.0
    %1572 = vmatpush1.msra.mxu0 %v1556
    %1573 = vmatprep.subr.mxu0 0.0
    %1574 = vmatpush1.msra.mxu0 0.0
    %1575 = vmatprep.subr.mxu0 0.0
    %1576 = vmatpush1.msra.mxu0 0.0
    %1577 = vmatprep.subr.mxu0 0.0
    %1578 = vmatpush1.msra.mxu0 0.0
    %1579 = vmatprep.subr.mxu0 0.0
    %1580 = vmatpush1.msra.mxu0 0.0
    %1581 = vmatprep.subr.mxu0 0.0
    %1582 = vmatpush1.msra.mxu0 0.0
    %1583 = vmatprep.subr.mxu0 0.0
    %1584 = vmatpush1.msra.mxu0 0.0
    %1585 = vmatprep.subr.mxu0 0.0
    %1586 = vmatpush1.msra.mxu0 0.0
    %1587 = vmatprep.subr.mxu0 0.0
    %1588 = vmatpush1.msra.mxu0 0.0
    %1589 = vmatprep.subr.mxu0 0.0
    %1590 = vmatpush1.msra.mxu0 0.0
    %1591 = vmatprep.subr.mxu0 0.0
    %1592 = vmatpush1.msra.mxu0 0.0
    %1593 = vmatprep.subr.mxu0 0.0
    %1594 = vmatpush1.msra.mxu0 0.0
    %1595 = vmatprep.subr.mxu0 0.0
    %1596 = vmatpush1.msra.mxu0 0.0
    %1597 = vmatprep.subr.mxu0 0.0
    %1598 = vmatpush1.msra.mxu0 0.0
    %1599 = vmatprep.subr.mxu0 0.0
    %1600 = vmatpush1.msra.mxu0 0.0
    %1601 = vmatprep.subr.mxu0 0.0
    %1602 = vmatpush1.msra.mxu0 0.0
    %1603 = vmatprep.subr.mxu0 0.0
    %1604 = vmatpush1.msra.mxu0 0.0
    %1605 = vmatprep.subr.mxu0 0.0
    %1606 = vmatpush1.msra.mxu0 0.0
    %1607 = vmatprep.subr.mxu0 0.0
    %1608 = vmatpush1.msra.mxu0 0.0
    %1609 = vmatprep.subr.mxu0 0.0
    %1610 = vmatpush1.msra.mxu0 0.0
    %1611 = vmatprep.subr.mxu0 0.0
    %1612 = vmatpush1.msra.mxu0 0.0
    %1613 = vmatprep.subr.mxu0 0.0
    %1614 = vmatpush1.msra.mxu0 0.0
    %1615 = vmatprep.subr.mxu0 0.0
    %1616 = vmatpush1.msra.mxu0 0.0
    %1617 = vmatprep.subr.mxu0 0.0
    %1618 = vmatpush1.msra.mxu0 0.0
    %1619 = vmatprep.subr.mxu0 0.0
    %1620 = vmatpush1.msra.mxu0 0.0
    %1621 = vmatprep.subr.mxu0 0.0
    %1622 = vmatpush1.msra.mxu0 0.0
    %1623 = vmatprep.subr.mxu0 0.0
    %1624 = vmatpush1.msra.mxu0 0.0
    %1625 = vmatprep.subr.mxu0 0.0
    %1626 = vmatpush1.msra.mxu0 0.0
    %1627 = vmatprep.subr.mxu0 0.0
    %1628 = vmatpush1.msra.mxu0 0.0
    %1629 = vmatprep.mubr.f32.mxu0 0.0
    %1630 = vmatmul.mubr.f32.gmra.mrb[0].mxu0 %v1563
    %v1631 = vpop.f32.mrb[0].mxu0
    %v1632 = vadd.f32 %v1561, %v1631
    %v1633 = vpop.f32.mrb[0].mxu0
    %1634 = vdwg.mxu0
    %v1635 = vtanh.pop %v1632
    %vm1636 = vcmask 254976
    %1637 = vst.msk [vmem:[#allocation7] sm:$0x3] %vm1636, %v1635
    // Predicated region
    $region30: #{bert_encoder.1} parent=1 // pred_check
      _
    $region31: #{bert_encoder.1} parent=1 // pred_check_branch
      %1639 = sbr.rel (0) target = $region33
    $region32: #{bert_encoder.1} parent=1 // pred_region
      _
    $region33: #{bert_encoder.1} parent=1 // pred_fallthru
      _
    // Predicated region
    $region34: #{bert_encoder.1} parent=1 // pred_check
      _
    $region35: #{bert_encoder.1} parent=1 // pred_check_branch
      %1641 = sbr.rel (0) target = $region37
    $region36: #{bert_encoder.1} parent=1 // pred_region
      %s1643 = ssub.s32 32, 32
      %1644 = vsyncadd [#allocation4], %s1643
      %s1646 = sshll.u32 [#allocation7], 4
      %s1647 = int_to_ptr.vmem [resolvable:$true] %s1646
      %1649 = dma.vmem_to_hbm [thread:$0]  %s1647, 32, %s6, [#allocation4]
    $region37: #{bert_encoder.1} parent=1 // pred_fallthru
      _
    // Predicated region
    $region38: #{bert_encoder.1} parent=1 // pred_check
      _
    $region39: #{bert_encoder.1} parent=1 // pred_check_branch
      %1651 = sbr.rel (0) target = $region41
    $region40: #{bert_encoder.1} parent=1 // pred_region
      _
    $region41: #{bert_encoder.1} parent=1 // pred_fallthru
      _
    // Predicated region
    $region42: #{bert_encoder.1} parent=1 // pred_check
      _
    $region43: #{bert_encoder.1} parent=1 // pred_check_branch
      %1653 = sbr.rel (0) target = $region45
    $region44: #{bert_encoder.1} parent=1 // pred_region
      %1654 = dma.done [#allocation4], 32
    $region45: #{bert_encoder.1} parent=1 // pred_fallthru
      _
    %1655 = vsyncpa [#allocation3], 1
    %1656 = vsyncpa [#allocation6], 1
    %1657 = vsyncpa [#allocation4], 1

</llo_original>
